<compile_context>
chip_gen: v5e
topology: v5e:2x2
jax: 0.10.0
libtpu: 0.0.40
codegen_flags: <defaults>
</compile_context>

<pallas_src>
import functools

import jax
import jax.numpy as jnp
from jax.experimental import pallas as pl
from jax.experimental.pallas import tpu as pltpu


def _round_up(x, m):
    return ((x + m - 1) // m) * m


# ---------------------------------------------------------------------------
# Kernel
# ---------------------------------------------------------------------------
def decoder_kernel(tok_ref,                    # (Bp,)  int32   SMEM (scalar prefetch)
                   emb_hbm,                    # (V, Hp)        f32  HBM (pl.ANY)
                   h_ref,                      # (L, Bp, Hp)    f32  VMEM
                   wih_ref, whh_ref,           # (L, Hp, 3Hp)   matmul dtype
                   ba_ref, bb_ref,             # (L, 1, 3Hp)    f32
                   wout_ref,                   # (Hp, Op)       matmul dtype
                   bout_ref,                   # (1, Op)        f32 (-1e30 in padded cols)
                   pred_ref,                   # (Bp, Op)       f32  out
                   hout_ref,                   # (L, Bp, Hp)    f32  out
                   x_scr,                      # (Bp, Hp)       f32  scratch
                   gather_sem,                 # (Bp,)          DMA semaphores
                   *, num_layers):
    Bp, Hp = x_scr.shape
    mm_dtype = wih_ref.dtype

    # ---- Embedding gather: only the Bp needed rows, HBM -> VMEM scratch. ----
    # Tokens are SMEM scalars; each row is an independent small DMA. Issue all
    # starts first, then wait, so the copies overlap each other.
    copies = []
    for b in range(Bp):
        cp = pltpu.make_async_copy(
            emb_hbm.at[pl.ds(tok_ref[b], 1), :],
            x_scr.at[pl.ds(b, 1), :],
            gather_sem.at[b])
        cp.start()
        copies.append(cp)
    for cp in copies:
        cp.wait()

    # ---- ReLU on the full (Bp, Hp) block: one dense VPU op, dense loads. ----
    x = jnp.maximum(x_scr[...], 0.0)                         # (Bp, Hp) f32

    # ---- Hoisted h-side gate matmuls (independent of the layer recurrence):
    # the L matmuls pipeline back-to-back on the MXU and overlap with the
    # x-path gate math of earlier layers.
    h_in, gh = [], []
    for l in range(num_layers):
        h_l = h_ref[l]                                       # (Bp, Hp) f32
        h_in.append(h_l)
        gh.append(jnp.dot(h_l.astype(mm_dtype), whh_ref[l],
                          preferred_element_type=jnp.float32) + bb_ref[l])

    # ---- Serial recurrence: one fused x-gate matmul per layer ([r,z,n] along
    # lanes), then VPU/EUP gate math in f32.
    for l in range(num_layers):
        gx = jnp.dot(x.astype(mm_dtype), wih_ref[l],
                     preferred_element_type=jnp.float32) + ba_ref[l]
        gh_l = gh[l]
        r = jax.nn.sigmoid(gx[:, 0:Hp] + gh_l[:, 0:Hp])
        z = jax.nn.sigmoid(gx[:, Hp:2 * Hp] + gh_l[:, Hp:2 * Hp])
        n = jnp.tanh(gx[:, 2 * Hp:3 * Hp] + r * gh_l[:, 2 * Hp:3 * Hp])
        h_new = (1.0 - z) * n + z * h_in[l]                  # (Bp, Hp) f32
        hout_ref[l] = h_new
        x = h_new

    # ---- Final projection + LogSoftmax(dim=1). Padded vocab columns carry a
    # -1e30 bias, so exp() underflows to 0 and they do not perturb the sum.
    logits = jnp.dot(x.astype(mm_dtype), wout_ref[...],
                     preferred_element_type=jnp.float32) + bout_ref[...]
    m = jnp.max(logits, axis=1, keepdims=True)
    s = logits - m
    pred_ref[...] = s - jnp.log(jnp.sum(jnp.exp(s), axis=1, keepdims=True))


# ---------------------------------------------------------------------------
# Host-side parameter preparation (PyTorch layout -> fused / padded kernel layout)
# ---------------------------------------------------------------------------
def prepare_params(params, matmul_dtype=jnp.bfloat16):
    V, H = params["embedding"].shape
    L = params["w_ih"].shape[0]
    O = params["w_out"].shape[0]
    Hp = _round_up(H, 128)
    Op = _round_up(O, 128)

    # Embedding table: pad feature dim with zeros; stays f32 and stays in HBM
    # (the kernel gathers individual rows via DMA).
    emb = jnp.zeros((V, Hp), jnp.float32).at[:, :H].set(params["embedding"])

    # GRU weights: torch (L, 3H, H) [gates r,z,n stacked] ->  (L, Hp, 3Hp) for x @ w,
    # gates concatenated along the lane axis at 128-aligned offsets.
    def fuse_pad(w):
        out = jnp.zeros((L, Hp, 3 * Hp), jnp.float32)
        for g in range(3):
            wg = jnp.transpose(w[:, g * H:(g + 1) * H, :], (0, 2, 1))   # (L, H_in, H_out)
            out = out.at[:, :H, g * Hp:g * Hp + H].set(wg)
        return out.astype(matmul_dtype)

    w_ih = fuse_pad(params["w_ih"])
    w_hh = fuse_pad(params["w_hh"])

    # Biases:  b_a = [b_ih_r + b_hh_r, b_ih_z + b_hh_z, b_ih_n]  (added to x-gates)
    #          b_b = [0,              0,               b_hh_n]  (added to h-gates)
    bih, bhh = params["b_ih"], params["b_hh"]                   # (L, 3H)
    b_a = jnp.zeros((L, 1, 3 * Hp), jnp.float32)
    b_b = jnp.zeros((L, 1, 3 * Hp), jnp.float32)
    for g in range(3):
        bi = bih[:, g * H:(g + 1) * H]
        bh = bhh[:, g * H:(g + 1) * H]
        val = bi + bh if g < 2 else bi
        b_a = b_a.at[:, 0, g * Hp:g * Hp + H].set(val)
    b_b = b_b.at[:, 0, 2 * Hp:2 * Hp + H].set(bhh[:, 2 * H:3 * H])

    # Output projection: torch (O, H) -> (Hp, Op) for x @ w; padded columns get
    # a huge negative bias so log-softmax ignores them.
    w_out = jnp.zeros((Hp, Op), jnp.float32).at[:H, :O].set(
        params["w_out"].T).astype(matmul_dtype)
    b_out = jnp.full((1, Op), -1e30, jnp.float32).at[0, :O].set(params["b_out"])

    return {"emb": emb, "w_ih": w_ih, "w_hh": w_hh, "b_a": b_a, "b_b": b_b,
            "w_out": w_out, "b_out": b_out, "dims": (L, H, Hp, O, Op)}


def _full_spec(shape):
    shape = tuple(shape)
    return pl.BlockSpec(shape, lambda i, tok: (0,) * len(shape))


# ---------------------------------------------------------------------------
# Wrapper
# ---------------------------------------------------------------------------
def decoder_forward(tokens, hidden, kparams):
    L, H, Hp, O, Op = kparams["dims"]
    B = tokens.shape[0]
    Bp = _round_up(B, 8)

    tok_p = jnp.zeros((Bp,), jnp.int32).at[:B].set(tokens.astype(jnp.int32))
    h_p = jnp.zeros((L, Bp, Hp), jnp.float32).at[:, :B, :H].set(hidden)

    grid_spec = pltpu.PrefetchScalarGridSpec(
        num_scalar_prefetch=1,                 # tokens -> SMEM
        grid=(1,),                             # single step: all weights resident
        in_specs=[
            pl.BlockSpec(memory_space=pl.ANY),  # embedding stays in HBM (row gather)
            _full_spec((L, Bp, Hp)),
            _full_spec(kparams["w_ih"].shape),
            _full_spec(kparams["w_hh"].shape),
            _full_spec(kparams["b_a"].shape),
            _full_spec(kparams["b_b"].shape),
            _full_spec(kparams["w_out"].shape),
            _full_spec(kparams["b_out"].shape),
        ],
        out_specs=[
            _full_spec((Bp, Op)),              # prediction (lane-dense, Op % 128 == 0)
            _full_spec((L, Bp, Hp)),           # new hidden
        ],
        scratch_shapes=[
            pltpu.VMEM((Bp, Hp), jnp.float32),     # gathered / ReLU'd embeddings
            pltpu.SemaphoreType.DMA((Bp,)),        # one sem per gathered row
        ],
    )

    pred_p, h_new_p = pl.pallas_call(
        functools.partial(decoder_kernel, num_layers=L),
        out_shape=(jax.ShapeDtypeStruct((Bp, Op), jnp.float32),
                   jax.ShapeDtypeStruct((L, Bp, Hp), jnp.float32)),
        grid_spec=grid_spec,
        # Alias padded hidden input (flat arg index 2, counting the scalar-prefetch
        # tokens at index 0) to the hidden output (output index 1): buffer donation,
        # no extra (L, Bp, Hp) HBM allocation per call.
        input_output_aliases={2: 1},
        compiler_params=pltpu.CompilerParams(
            dimension_semantics=("arbitrary",),
            vmem_limit_bytes=32 * 1024 * 1024,   # explicit budget; safe on v7x (64 MiB phys)
        ),
    )(tok_p, kparams["emb"], h_p, kparams["w_ih"], kparams["w_hh"],
      kparams["b_a"], kparams["b_b"], kparams["w_out"], kparams["b_out"])

    return pred_p[:B, :O], h_new_p[:, :B, :H]


# ---------------------------------------------------------------------------
# Pure-JAX reference (PyTorch Decoder.forward semantics); matmul_dtype lets it
# mimic the kernel's bf16-MXU / f32-accumulate arithmetic for tight comparison.
# ---------------------------------------------------------------------------
def ref_forward(tokens, hidden, params, matmul_dtype=None):
    cast = (lambda a: a.astype(matmul_dtype)) if matmul_dtype is not None else (lambda a: a)
    x = jax.nn.relu(jnp.take(params["embedding"], tokens, axis=0))
    L, _, H = hidden.shape
    new_h = []
    for l in range(L):
        h = hidden[l]
        wih, whh = params["w_ih"][l], params["w_hh"][l]      # (3H, H)
        bih, bhh = params["b_ih"][l], params["b_hh"][l]      # (3H,)
        gx = jnp.dot(cast(x), cast(wih.T), preferred_element_type=jnp.float32) + bih
        gh = jnp.dot(cast(h), cast(whh.T), preferred_element_type=jnp.float32) + bhh
        r = jax.nn.sigmoid(gx[:, :H] + gh[:, :H])
        z = jax.nn.sigmoid(gx[:, H:2 * H] + gh[:, H:2 * H])
        n = jnp.tanh(gx[:, 2 * H:] + r * gh[:, 2 * H:])
        h = (1.0 - z) * n + z * h
        new_h.append(h)
        x = h
    logits = jnp.dot(cast(x), cast(params["w_out"].T),
                     preferred_element_type=jnp.float32) + params["b_out"]
    return jax.nn.log_softmax(logits, axis=1), jnp.stack(new_h)


def init_params(key, output_dim, hidden_dim, num_layers):
    """Parameters in the PyTorch layout (GRU gate order [r, z, n])."""
    k = 1.0 / jnp.sqrt(jnp.float32(hidden_dim))
    keys = jax.random.split(key, 7)
    u = lambda kk, shp: jax.random.uniform(kk, shp, jnp.float32, -k, k)
    return {
        "embedding": u(keys[0], (output_dim, hidden_dim)),
        "w_ih": u(keys[1], (num_layers, 3 * hidden_dim, hidden_dim)),
        "w_hh": u(keys[2], (num_layers, 3 * hidden_dim, hidden_dim)),
        "b_ih": u(keys[3], (num_layers, 3 * hidden_dim)),
        "b_hh": u(keys[4], (num_layers, 3 * hidden_dim)),
        "w_out": u(keys[5], (output_dim, hidden_dim)),
        "b_out": u(keys[6], (output_dim,)),
    }


if __name__ == "__main__":
    output_dim, hidden_dim, num_layers, batch = 64, 32, 2, 2

    root = jax.random.PRNGKey(0)
    k_par, k_tok, k_hid = jax.random.split(root, 3)
    params = init_params(k_par, output_dim, hidden_dim, num_layers)
    tokens = jax.random.randint(k_tok, (batch,), 0, output_dim, dtype=jnp.int32)
    hidden = jax.random.normal(k_hid, (num_layers, batch, hidden_dim), jnp.float32)

    # --- bf16 MXU path (default fast path on v5e/v6e/v7x), f32 accumulation ---
    kp_bf16 = prepare_params(params, matmul_dtype=jnp.bfloat16)
    pred16, h16 = decoder_forward(tokens, hidden, kp_bf16)
    jax.block_until_ready((pred16, h16))
    pref16, href16 = ref_forward(tokens, hidden, params, matmul_dtype=jnp.bfloat16)
    assert pred16.shape == (batch, output_dim)
    assert h16.shape == (num_layers, batch, hidden_dim)
    assert jnp.allclose(pred16, pref16, atol=2e-3, rtol=2e-3)
    assert jnp.allclose(h16, href16, atol=2e-3, rtol=2e-3)

    # --- f32 weight path (validation; default dot precision on both sides) ---
    kp_f32 = prepare_params(params, matmul_dtype=jnp.float32)
    pred32, h32 = decoder_forward(tokens, hidden, kp_f32)
    jax.block_until_ready((pred32, h32))
    pref32, href32 = ref_forward(tokens, hidden, params, matmul_dtype=None)
    assert jnp.allclose(pred32, pref32, atol=2e-5, rtol=2e-5)
    assert jnp.allclose(h32, href32, atol=2e-5, rtol=2e-5)

    print("KERNEL_OK")
</pallas_src>

<mosaic_0001>
module attributes {stable_mosaic.version = 11 : i64} {
  func.func @decoder_kernel(%arg0: i32, %arg1: memref<8xi32, #tpu.memory_space<smem>>, %arg2: memref<64x128xf32, #tpu.memory_space<any>>, %arg3: memref<2x8x128xf32, #tpu.memory_space<vmem>>, %arg4: memref<2x128x384xbf16, #tpu.memory_space<vmem>>, %arg5: memref<2x128x384xbf16, #tpu.memory_space<vmem>>, %arg6: memref<2x1x384xf32, #tpu.memory_space<vmem>>, %arg7: memref<2x1x384xf32, #tpu.memory_space<vmem>>, %arg8: memref<128x128xbf16, #tpu.memory_space<vmem>>, %arg9: memref<1x128xf32, #tpu.memory_space<vmem>>, %arg10: memref<8x128xf32, #tpu.memory_space<vmem>>, %arg11: memref<2x8x128xf32, #tpu.memory_space<vmem>>, %arg12: memref<8x128xf32, #tpu.memory_space<vmem>>, %arg13: memref<8x!tpu.dma_semaphore, #tpu.memory_space<semaphore_mem>>) attributes {dimension_semantics = [#tpu.dimension_semantics<arbitrary>], iteration_bounds = array<i64: 1>, scalar_prefetch = 1 : i64, scratch_operands = 2 : i64, tpu.core_type = #tpu.core_type<tc>, window_params = [{}, {pipeline_mode = #tpu.pipeline_mode<synchronous>, transform_indices = @transform_1, window_bounds = array<i64: 2, 8, 128>}, {pipeline_mode = #tpu.pipeline_mode<synchronous>, transform_indices = @transform_2, window_bounds = array<i64: 2, 128, 384>}, {pipeline_mode = #tpu.pipeline_mode<synchronous>, transform_indices = @transform_3, window_bounds = array<i64: 2, 128, 384>}, {pipeline_mode = #tpu.pipeline_mode<synchronous>, transform_indices = @transform_4, window_bounds = array<i64: 2, 1, 384>}, {pipeline_mode = #tpu.pipeline_mode<synchronous>, transform_indices = @transform_5, window_bounds = array<i64: 2, 1, 384>}, {pipeline_mode = #tpu.pipeline_mode<synchronous>, transform_indices = @transform_6, window_bounds = array<i64: 128, 128>}, {pipeline_mode = #tpu.pipeline_mode<synchronous>, transform_indices = @transform_7, window_bounds = array<i64: 1, 128>}, {pipeline_mode = #tpu.pipeline_mode<synchronous>, transform_indices = @transform_8, window_bounds = array<i64: 8, 128>}, {pipeline_mode = #tpu.pipeline_mode<synchronous>, transform_indices = @transform_9, window_bounds = array<i64: 2, 8, 128>}]} {
    %c0 = arith.constant 0 : index
    %0 = memref.load %arg1[%c0] : memref<8xi32, #tpu.memory_space<smem>>
    %c0_i32 = arith.constant 0 : i32
    %c0_i32_0 = arith.constant 0 : i32
    %1 = tpu.memref_slice %arg2[%0, %c0_i32_0] : memref<64x128xf32, #tpu.memory_space<any>> -> memref<1x128xf32, #tpu.memory_space<any>>
    %c0_i32_1 = arith.constant 0 : i32
    %c0_i32_2 = arith.constant 0 : i32
    %2 = tpu.memref_slice %arg12[%c0_i32_1, %c0_i32_2] : memref<8x128xf32, #tpu.memory_space<vmem>> -> memref<1x128xf32, #tpu.memory_space<vmem>>
    %3 = tpu.memref_slice %arg13[%c0_i32] : memref<8x!tpu.dma_semaphore, #tpu.memory_space<semaphore_mem>> -> memref<1x!tpu.dma_semaphore, #tpu.memory_space<semaphore_mem>>
    %4 = tpu.memref_squeeze %3 : memref<1x!tpu.dma_semaphore, #tpu.memory_space<semaphore_mem>> -> memref<!tpu.dma_semaphore, #tpu.memory_space<semaphore_mem>>
    tpu.enqueue_dma source(%1 : memref<1x128xf32, #tpu.memory_space<any>>) target(%2 : memref<1x128xf32, #tpu.memory_space<vmem>>) target_semaphore(%4 : memref<!tpu.dma_semaphore, #tpu.memory_space<semaphore_mem>>)
    %c1 = arith.constant 1 : index
    %5 = memref.load %arg1[%c1] : memref<8xi32, #tpu.memory_space<smem>>
    %c1_i32 = arith.constant 1 : i32
    %c0_i32_3 = arith.constant 0 : i32
    %6 = tpu.memref_slice %arg2[%5, %c0_i32_3] : memref<64x128xf32, #tpu.memory_space<any>> -> memref<1x128xf32, #tpu.memory_space<any>>
    %c1_i32_4 = arith.constant 1 : i32
    %c0_i32_5 = arith.constant 0 : i32
    %7 = tpu.memref_slice %arg12[%c1_i32_4, %c0_i32_5] : memref<8x128xf32, #tpu.memory_space<vmem>> -> memref<1x128xf32, #tpu.memory_space<vmem>>
    %8 = tpu.memref_slice %arg13[%c1_i32] : memref<8x!tpu.dma_semaphore, #tpu.memory_space<semaphore_mem>> -> memref<1x!tpu.dma_semaphore, #tpu.memory_space<semaphore_mem>>
    %9 = tpu.memref_squeeze %8 : memref<1x!tpu.dma_semaphore, #tpu.memory_space<semaphore_mem>> -> memref<!tpu.dma_semaphore, #tpu.memory_space<semaphore_mem>>
    tpu.enqueue_dma source(%6 : memref<1x128xf32, #tpu.memory_space<any>>) target(%7 : memref<1x128xf32, #tpu.memory_space<vmem>>) target_semaphore(%9 : memref<!tpu.dma_semaphore, #tpu.memory_space<semaphore_mem>>)
    %c2 = arith.constant 2 : index
    %10 = memref.load %arg1[%c2] : memref<8xi32, #tpu.memory_space<smem>>
    %c2_i32 = arith.constant 2 : i32
    %c0_i32_6 = arith.constant 0 : i32
    %11 = tpu.memref_slice %arg2[%10, %c0_i32_6] : memref<64x128xf32, #tpu.memory_space<any>> -> memref<1x128xf32, #tpu.memory_space<any>>
    %c2_i32_7 = arith.constant 2 : i32
    %c0_i32_8 = arith.constant 0 : i32
    %12 = tpu.memref_slice %arg12[%c2_i32_7, %c0_i32_8] : memref<8x128xf32, #tpu.memory_space<vmem>> -> memref<1x128xf32, #tpu.memory_space<vmem>>
    %13 = tpu.memref_slice %arg13[%c2_i32] : memref<8x!tpu.dma_semaphore, #tpu.memory_space<semaphore_mem>> -> memref<1x!tpu.dma_semaphore, #tpu.memory_space<semaphore_mem>>
    %14 = tpu.memref_squeeze %13 : memref<1x!tpu.dma_semaphore, #tpu.memory_space<semaphore_mem>> -> memref<!tpu.dma_semaphore, #tpu.memory_space<semaphore_mem>>
    tpu.enqueue_dma source(%11 : memref<1x128xf32, #tpu.memory_space<any>>) target(%12 : memref<1x128xf32, #tpu.memory_space<vmem>>) target_semaphore(%14 : memref<!tpu.dma_semaphore, #tpu.memory_space<semaphore_mem>>)
    %c3 = arith.constant 3 : index
    %15 = memref.load %arg1[%c3] : memref<8xi32, #tpu.memory_space<smem>>
    %c3_i32 = arith.constant 3 : i32
    %c0_i32_9 = arith.constant 0 : i32
    %16 = tpu.memref_slice %arg2[%15, %c0_i32_9] : memref<64x128xf32, #tpu.memory_space<any>> -> memref<1x128xf32, #tpu.memory_space<any>>
    %c3_i32_10 = arith.constant 3 : i32
    %c0_i32_11 = arith.constant 0 : i32
    %17 = tpu.memref_slice %arg12[%c3_i32_10, %c0_i32_11] : memref<8x128xf32, #tpu.memory_space<vmem>> -> memref<1x128xf32, #tpu.memory_space<vmem>>
    %18 = tpu.memref_slice %arg13[%c3_i32] : memref<8x!tpu.dma_semaphore, #tpu.memory_space<semaphore_mem>> -> memref<1x!tpu.dma_semaphore, #tpu.memory_space<semaphore_mem>>
    %19 = tpu.memref_squeeze %18 : memref<1x!tpu.dma_semaphore, #tpu.memory_space<semaphore_mem>> -> memref<!tpu.dma_semaphore, #tpu.memory_space<semaphore_mem>>
    tpu.enqueue_dma source(%16 : memref<1x128xf32, #tpu.memory_space<any>>) target(%17 : memref<1x128xf32, #tpu.memory_space<vmem>>) target_semaphore(%19 : memref<!tpu.dma_semaphore, #tpu.memory_space<semaphore_mem>>)
    %c4 = arith.constant 4 : index
    %20 = memref.load %arg1[%c4] : memref<8xi32, #tpu.memory_space<smem>>
    %c4_i32 = arith.constant 4 : i32
    %c0_i32_12 = arith.constant 0 : i32
    %21 = tpu.memref_slice %arg2[%20, %c0_i32_12] : memref<64x128xf32, #tpu.memory_space<any>> -> memref<1x128xf32, #tpu.memory_space<any>>
    %c4_i32_13 = arith.constant 4 : i32
    %c0_i32_14 = arith.constant 0 : i32
    %22 = tpu.memref_slice %arg12[%c4_i32_13, %c0_i32_14] : memref<8x128xf32, #tpu.memory_space<vmem>> -> memref<1x128xf32, #tpu.memory_space<vmem>>
    %23 = tpu.memref_slice %arg13[%c4_i32] : memref<8x!tpu.dma_semaphore, #tpu.memory_space<semaphore_mem>> -> memref<1x!tpu.dma_semaphore, #tpu.memory_space<semaphore_mem>>
    %24 = tpu.memref_squeeze %23 : memref<1x!tpu.dma_semaphore, #tpu.memory_space<semaphore_mem>> -> memref<!tpu.dma_semaphore, #tpu.memory_space<semaphore_mem>>
    tpu.enqueue_dma source(%21 : memref<1x128xf32, #tpu.memory_space<any>>) target(%22 : memref<1x128xf32, #tpu.memory_space<vmem>>) target_semaphore(%24 : memref<!tpu.dma_semaphore, #tpu.memory_space<semaphore_mem>>)
    %c5 = arith.constant 5 : index
    %25 = memref.load %arg1[%c5] : memref<8xi32, #tpu.memory_space<smem>>
    %c5_i32 = arith.constant 5 : i32
    %c0_i32_15 = arith.constant 0 : i32
    %26 = tpu.memref_slice %arg2[%25, %c0_i32_15] : memref<64x128xf32, #tpu.memory_space<any>> -> memref<1x128xf32, #tpu.memory_space<any>>
    %c5_i32_16 = arith.constant 5 : i32
    %c0_i32_17 = arith.constant 0 : i32
    %27 = tpu.memref_slice %arg12[%c5_i32_16, %c0_i32_17] : memref<8x128xf32, #tpu.memory_space<vmem>> -> memref<1x128xf32, #tpu.memory_space<vmem>>
    %28 = tpu.memref_slice %arg13[%c5_i32] : memref<8x!tpu.dma_semaphore, #tpu.memory_space<semaphore_mem>> -> memref<1x!tpu.dma_semaphore, #tpu.memory_space<semaphore_mem>>
    %29 = tpu.memref_squeeze %28 : memref<1x!tpu.dma_semaphore, #tpu.memory_space<semaphore_mem>> -> memref<!tpu.dma_semaphore, #tpu.memory_space<semaphore_mem>>
    tpu.enqueue_dma source(%26 : memref<1x128xf32, #tpu.memory_space<any>>) target(%27 : memref<1x128xf32, #tpu.memory_space<vmem>>) target_semaphore(%29 : memref<!tpu.dma_semaphore, #tpu.memory_space<semaphore_mem>>)
    %c6 = arith.constant 6 : index
    %30 = memref.load %arg1[%c6] : memref<8xi32, #tpu.memory_space<smem>>
    %c6_i32 = arith.constant 6 : i32
    %c0_i32_18 = arith.constant 0 : i32
    %31 = tpu.memref_slice %arg2[%30, %c0_i32_18] : memref<64x128xf32, #tpu.memory_space<any>> -> memref<1x128xf32, #tpu.memory_space<any>>
    %c6_i32_19 = arith.constant 6 : i32
    %c0_i32_20 = arith.constant 0 : i32
    %32 = tpu.memref_slice %arg12[%c6_i32_19, %c0_i32_20] : memref<8x128xf32, #tpu.memory_space<vmem>> -> memref<1x128xf32, #tpu.memory_space<vmem>>
    %33 = tpu.memref_slice %arg13[%c6_i32] : memref<8x!tpu.dma_semaphore, #tpu.memory_space<semaphore_mem>> -> memref<1x!tpu.dma_semaphore, #tpu.memory_space<semaphore_mem>>
    %34 = tpu.memref_squeeze %33 : memref<1x!tpu.dma_semaphore, #tpu.memory_space<semaphore_mem>> -> memref<!tpu.dma_semaphore, #tpu.memory_space<semaphore_mem>>
    tpu.enqueue_dma source(%31 : memref<1x128xf32, #tpu.memory_space<any>>) target(%32 : memref<1x128xf32, #tpu.memory_space<vmem>>) target_semaphore(%34 : memref<!tpu.dma_semaphore, #tpu.memory_space<semaphore_mem>>)
    %c7 = arith.constant 7 : index
    %35 = memref.load %arg1[%c7] : memref<8xi32, #tpu.memory_space<smem>>
    %c7_i32 = arith.constant 7 : i32
    %c0_i32_21 = arith.constant 0 : i32
    %36 = tpu.memref_slice %arg2[%35, %c0_i32_21] : memref<64x128xf32, #tpu.memory_space<any>> -> memref<1x128xf32, #tpu.memory_space<any>>
    %c7_i32_22 = arith.constant 7 : i32
    %c0_i32_23 = arith.constant 0 : i32
    %37 = tpu.memref_slice %arg12[%c7_i32_22, %c0_i32_23] : memref<8x128xf32, #tpu.memory_space<vmem>> -> memref<1x128xf32, #tpu.memory_space<vmem>>
    %38 = tpu.memref_slice %arg13[%c7_i32] : memref<8x!tpu.dma_semaphore, #tpu.memory_space<semaphore_mem>> -> memref<1x!tpu.dma_semaphore, #tpu.memory_space<semaphore_mem>>
    %39 = tpu.memref_squeeze %38 : memref<1x!tpu.dma_semaphore, #tpu.memory_space<semaphore_mem>> -> memref<!tpu.dma_semaphore, #tpu.memory_space<semaphore_mem>>
    tpu.enqueue_dma source(%36 : memref<1x128xf32, #tpu.memory_space<any>>) target(%37 : memref<1x128xf32, #tpu.memory_space<vmem>>) target_semaphore(%39 : memref<!tpu.dma_semaphore, #tpu.memory_space<semaphore_mem>>)
    %c0_i32_24 = arith.constant 0 : i32
    %c0_i32_25 = arith.constant 0 : i32
    %40 = tpu.memref_slice %arg2[%0, %c0_i32_25] : memref<64x128xf32, #tpu.memory_space<any>> -> memref<1x128xf32, #tpu.memory_space<any>>
    %c0_i32_26 = arith.constant 0 : i32
    %c0_i32_27 = arith.constant 0 : i32
    %41 = tpu.memref_slice %arg12[%c0_i32_26, %c0_i32_27] : memref<8x128xf32, #tpu.memory_space<vmem>> -> memref<1x128xf32, #tpu.memory_space<vmem>>
    %42 = tpu.memref_slice %arg13[%c0_i32_24] : memref<8x!tpu.dma_semaphore, #tpu.memory_space<semaphore_mem>> -> memref<1x!tpu.dma_semaphore, #tpu.memory_space<semaphore_mem>>
    %43 = tpu.memref_squeeze %42 : memref<1x!tpu.dma_semaphore, #tpu.memory_space<semaphore_mem>> -> memref<!tpu.dma_semaphore, #tpu.memory_space<semaphore_mem>>
    tpu.wait_dma2 semaphore(%43 : memref<!tpu.dma_semaphore, #tpu.memory_space<semaphore_mem>>) src(%40 : memref<1x128xf32, #tpu.memory_space<any>>) dst(%41 : memref<1x128xf32, #tpu.memory_space<vmem>>)
    %c1_i32_28 = arith.constant 1 : i32
    %c0_i32_29 = arith.constant 0 : i32
    %44 = tpu.memref_slice %arg2[%5, %c0_i32_29] : memref<64x128xf32, #tpu.memory_space<any>> -> memref<1x128xf32, #tpu.memory_space<any>>
    %c1_i32_30 = arith.constant 1 : i32
    %c0_i32_31 = arith.constant 0 : i32
    %45 = tpu.memref_slice %arg12[%c1_i32_30, %c0_i32_31] : memref<8x128xf32, #tpu.memory_space<vmem>> -> memref<1x128xf32, #tpu.memory_space<vmem>>
    %46 = tpu.memref_slice %arg13[%c1_i32_28] : memref<8x!tpu.dma_semaphore, #tpu.memory_space<semaphore_mem>> -> memref<1x!tpu.dma_semaphore, #tpu.memory_space<semaphore_mem>>
    %47 = tpu.memref_squeeze %46 : memref<1x!tpu.dma_semaphore, #tpu.memory_space<semaphore_mem>> -> memref<!tpu.dma_semaphore, #tpu.memory_space<semaphore_mem>>
    tpu.wait_dma2 semaphore(%47 : memref<!tpu.dma_semaphore, #tpu.memory_space<semaphore_mem>>) src(%44 : memref<1x128xf32, #tpu.memory_space<any>>) dst(%45 : memref<1x128xf32, #tpu.memory_space<vmem>>)
    %c2_i32_32 = arith.constant 2 : i32
    %c0_i32_33 = arith.constant 0 : i32
    %48 = tpu.memref_slice %arg2[%10, %c0_i32_33] : memref<64x128xf32, #tpu.memory_space<any>> -> memref<1x128xf32, #tpu.memory_space<any>>
    %c2_i32_34 = arith.constant 2 : i32
    %c0_i32_35 = arith.constant 0 : i32
    %49 = tpu.memref_slice %arg12[%c2_i32_34, %c0_i32_35] : memref<8x128xf32, #tpu.memory_space<vmem>> -> memref<1x128xf32, #tpu.memory_space<vmem>>
    %50 = tpu.memref_slice %arg13[%c2_i32_32] : memref<8x!tpu.dma_semaphore, #tpu.memory_space<semaphore_mem>> -> memref<1x!tpu.dma_semaphore, #tpu.memory_space<semaphore_mem>>
    %51 = tpu.memref_squeeze %50 : memref<1x!tpu.dma_semaphore, #tpu.memory_space<semaphore_mem>> -> memref<!tpu.dma_semaphore, #tpu.memory_space<semaphore_mem>>
    tpu.wait_dma2 semaphore(%51 : memref<!tpu.dma_semaphore, #tpu.memory_space<semaphore_mem>>) src(%48 : memref<1x128xf32, #tpu.memory_space<any>>) dst(%49 : memref<1x128xf32, #tpu.memory_space<vmem>>)
    %c3_i32_36 = arith.constant 3 : i32
    %c0_i32_37 = arith.constant 0 : i32
    %52 = tpu.memref_slice %arg2[%15, %c0_i32_37] : memref<64x128xf32, #tpu.memory_space<any>> -> memref<1x128xf32, #tpu.memory_space<any>>
    %c3_i32_38 = arith.constant 3 : i32
    %c0_i32_39 = arith.constant 0 : i32
    %53 = tpu.memref_slice %arg12[%c3_i32_38, %c0_i32_39] : memref<8x128xf32, #tpu.memory_space<vmem>> -> memref<1x128xf32, #tpu.memory_space<vmem>>
    %54 = tpu.memref_slice %arg13[%c3_i32_36] : memref<8x!tpu.dma_semaphore, #tpu.memory_space<semaphore_mem>> -> memref<1x!tpu.dma_semaphore, #tpu.memory_space<semaphore_mem>>
    %55 = tpu.memref_squeeze %54 : memref<1x!tpu.dma_semaphore, #tpu.memory_space<semaphore_mem>> -> memref<!tpu.dma_semaphore, #tpu.memory_space<semaphore_mem>>
    tpu.wait_dma2 semaphore(%55 : memref<!tpu.dma_semaphore, #tpu.memory_space<semaphore_mem>>) src(%52 : memref<1x128xf32, #tpu.memory_space<any>>) dst(%53 : memref<1x128xf32, #tpu.memory_space<vmem>>)
    %c4_i32_40 = arith.constant 4 : i32
    %c0_i32_41 = arith.constant 0 : i32
    %56 = tpu.memref_slice %arg2[%20, %c0_i32_41] : memref<64x128xf32, #tpu.memory_space<any>> -> memref<1x128xf32, #tpu.memory_space<any>>
    %c4_i32_42 = arith.constant 4 : i32
    %c0_i32_43 = arith.constant 0 : i32
    %57 = tpu.memref_slice %arg12[%c4_i32_42, %c0_i32_43] : memref<8x128xf32, #tpu.memory_space<vmem>> -> memref<1x128xf32, #tpu.memory_space<vmem>>
    %58 = tpu.memref_slice %arg13[%c4_i32_40] : memref<8x!tpu.dma_semaphore, #tpu.memory_space<semaphore_mem>> -> memref<1x!tpu.dma_semaphore, #tpu.memory_space<semaphore_mem>>
    %59 = tpu.memref_squeeze %58 : memref<1x!tpu.dma_semaphore, #tpu.memory_space<semaphore_mem>> -> memref<!tpu.dma_semaphore, #tpu.memory_space<semaphore_mem>>
    tpu.wait_dma2 semaphore(%59 : memref<!tpu.dma_semaphore, #tpu.memory_space<semaphore_mem>>) src(%56 : memref<1x128xf32, #tpu.memory_space<any>>) dst(%57 : memref<1x128xf32, #tpu.memory_space<vmem>>)
    %c5_i32_44 = arith.constant 5 : i32
    %c0_i32_45 = arith.constant 0 : i32
    %60 = tpu.memref_slice %arg2[%25, %c0_i32_45] : memref<64x128xf32, #tpu.memory_space<any>> -> memref<1x128xf32, #tpu.memory_space<any>>
    %c5_i32_46 = arith.constant 5 : i32
    %c0_i32_47 = arith.constant 0 : i32
    %61 = tpu.memref_slice %arg12[%c5_i32_46, %c0_i32_47] : memref<8x128xf32, #tpu.memory_space<vmem>> -> memref<1x128xf32, #tpu.memory_space<vmem>>
    %62 = tpu.memref_slice %arg13[%c5_i32_44] : memref<8x!tpu.dma_semaphore, #tpu.memory_space<semaphore_mem>> -> memref<1x!tpu.dma_semaphore, #tpu.memory_space<semaphore_mem>>
    %63 = tpu.memref_squeeze %62 : memref<1x!tpu.dma_semaphore, #tpu.memory_space<semaphore_mem>> -> memref<!tpu.dma_semaphore, #tpu.memory_space<semaphore_mem>>
    tpu.wait_dma2 semaphore(%63 : memref<!tpu.dma_semaphore, #tpu.memory_space<semaphore_mem>>) src(%60 : memref<1x128xf32, #tpu.memory_space<any>>) dst(%61 : memref<1x128xf32, #tpu.memory_space<vmem>>)
    %c6_i32_48 = arith.constant 6 : i32
    %c0_i32_49 = arith.constant 0 : i32
    %64 = tpu.memref_slice %arg2[%30, %c0_i32_49] : memref<64x128xf32, #tpu.memory_space<any>> -> memref<1x128xf32, #tpu.memory_space<any>>
    %c6_i32_50 = arith.constant 6 : i32
    %c0_i32_51 = arith.constant 0 : i32
    %65 = tpu.memref_slice %arg12[%c6_i32_50, %c0_i32_51] : memref<8x128xf32, #tpu.memory_space<vmem>> -> memref<1x128xf32, #tpu.memory_space<vmem>>
    %66 = tpu.memref_slice %arg13[%c6_i32_48] : memref<8x!tpu.dma_semaphore, #tpu.memory_space<semaphore_mem>> -> memref<1x!tpu.dma_semaphore, #tpu.memory_space<semaphore_mem>>
    %67 = tpu.memref_squeeze %66 : memref<1x!tpu.dma_semaphore, #tpu.memory_space<semaphore_mem>> -> memref<!tpu.dma_semaphore, #tpu.memory_space<semaphore_mem>>
    tpu.wait_dma2 semaphore(%67 : memref<!tpu.dma_semaphore, #tpu.memory_space<semaphore_mem>>) src(%64 : memref<1x128xf32, #tpu.memory_space<any>>) dst(%65 : memref<1x128xf32, #tpu.memory_space<vmem>>)
    %c7_i32_52 = arith.constant 7 : i32
    %c0_i32_53 = arith.constant 0 : i32
    %68 = tpu.memref_slice %arg2[%35, %c0_i32_53] : memref<64x128xf32, #tpu.memory_space<any>> -> memref<1x128xf32, #tpu.memory_space<any>>
    %c7_i32_54 = arith.constant 7 : i32
    %c0_i32_55 = arith.constant 0 : i32
    %69 = tpu.memref_slice %arg12[%c7_i32_54, %c0_i32_55] : memref<8x128xf32, #tpu.memory_space<vmem>> -> memref<1x128xf32, #tpu.memory_space<vmem>>
    %70 = tpu.memref_slice %arg13[%c7_i32_52] : memref<8x!tpu.dma_semaphore, #tpu.memory_space<semaphore_mem>> -> memref<1x!tpu.dma_semaphore, #tpu.memory_space<semaphore_mem>>
    %71 = tpu.memref_squeeze %70 : memref<1x!tpu.dma_semaphore, #tpu.memory_space<semaphore_mem>> -> memref<!tpu.dma_semaphore, #tpu.memory_space<semaphore_mem>>
    tpu.wait_dma2 semaphore(%71 : memref<!tpu.dma_semaphore, #tpu.memory_space<semaphore_mem>>) src(%68 : memref<1x128xf32, #tpu.memory_space<any>>) dst(%69 : memref<1x128xf32, #tpu.memory_space<vmem>>)
    %c0_56 = arith.constant 0 : index
    %c0_57 = arith.constant 0 : index
    %72 = vector.load %arg12[%c0_56, %c0_57] : memref<8x128xf32, #tpu.memory_space<vmem>>, vector<8x128xf32>
    %cst = arith.constant 0.000000e+00 : f32
    %73 = vector.broadcast %cst : f32 to vector<8x128xf32>
    %74 = arith.maximumf %72, %73 : vector<8x128xf32>
    %c0_58 = arith.constant 0 : index
    %c0_59 = arith.constant 0 : index
    %c0_60 = arith.constant 0 : index
    %75 = vector.load %arg3[%c0_58, %c0_59, %c0_60] : memref<2x8x128xf32, #tpu.memory_space<vmem>>, vector<1x8x128xf32>
    %76 = vector.shape_cast %75 : vector<1x8x128xf32> to vector<8x128xf32>
    %77 = arith.truncf %76 : vector<8x128xf32> to vector<8x128xbf16>
    %c0_61 = arith.constant 0 : index
    %c0_62 = arith.constant 0 : index
    %c0_63 = arith.constant 0 : index
    %78 = vector.load %arg5[%c0_61, %c0_62, %c0_63] : memref<2x128x384xbf16, #tpu.memory_space<vmem>>, vector<1x128x384xbf16>
    %79 = vector.shape_cast %78 : vector<1x128x384xbf16> to vector<128x384xbf16>
    %cst_64 = arith.constant dense<0.000000e+00> : vector<8x384xf32>
    %80 = tpu.matmul %77, %79, %cst_64 {dimension_numbers = #tpu.dot_dimension_numbers<[1], [0], [0], [1], [0, 0, 1, 1], [], []>} : vector<8x128xbf16>, vector<128x384xbf16>, vector<8x384xf32> -> vector<8x384xf32>
    %c0_65 = arith.constant 0 : index
    %c0_66 = arith.constant 0 : index
    %c0_67 = arith.constant 0 : index
    %81 = vector.load %arg7[%c0_65, %c0_66, %c0_67] : memref<2x1x384xf32, #tpu.memory_space<vmem>>, vector<1x1x384xf32>
    %82 = vector.shape_cast %81 : vector<1x1x384xf32> to vector<1x384xf32>
    %83 = vector.broadcast %82 : vector<1x384xf32> to vector<8x384xf32>
    %84 = arith.addf %80, %83 : vector<8x384xf32>
    %c1_68 = arith.constant 1 : index
    %c0_69 = arith.constant 0 : index
    %c0_70 = arith.constant 0 : index
    %85 = vector.load %arg3[%c1_68, %c0_69, %c0_70] : memref<2x8x128xf32, #tpu.memory_space<vmem>>, vector<1x8x128xf32>
    %86 = vector.shape_cast %85 : vector<1x8x128xf32> to vector<8x128xf32>
    %87 = arith.truncf %86 : vector<8x128xf32> to vector<8x128xbf16>
    %c1_71 = arith.constant 1 : index
    %c0_72 = arith.constant 0 : index
    %c0_73 = arith.constant 0 : index
    %88 = vector.load %arg5[%c1_71, %c0_72, %c0_73] : memref<2x128x384xbf16, #tpu.memory_space<vmem>>, vector<1x128x384xbf16>
    %89 = vector.shape_cast %88 : vector<1x128x384xbf16> to vector<128x384xbf16>
    %cst_74 = arith.constant dense<0.000000e+00> : vector<8x384xf32>
    %90 = tpu.matmul %87, %89, %cst_74 {dimension_numbers = #tpu.dot_dimension_numbers<[1], [0], [0], [1], [0, 0, 1, 1], [], []>} : vector<8x128xbf16>, vector<128x384xbf16>, vector<8x384xf32> -> vector<8x384xf32>
    %c1_75 = arith.constant 1 : index
    %c0_76 = arith.constant 0 : index
    %c0_77 = arith.constant 0 : index
    %91 = vector.load %arg7[%c1_75, %c0_76, %c0_77] : memref<2x1x384xf32, #tpu.memory_space<vmem>>, vector<1x1x384xf32>
    %92 = vector.shape_cast %91 : vector<1x1x384xf32> to vector<1x384xf32>
    %93 = vector.broadcast %92 : vector<1x384xf32> to vector<8x384xf32>
    %94 = arith.addf %90, %93 : vector<8x384xf32>
    %95 = arith.truncf %74 : vector<8x128xf32> to vector<8x128xbf16>
    %c0_78 = arith.constant 0 : index
    %c0_79 = arith.constant 0 : index
    %c0_80 = arith.constant 0 : index
    %96 = vector.load %arg4[%c0_78, %c0_79, %c0_80] : memref<2x128x384xbf16, #tpu.memory_space<vmem>>, vector<1x128x384xbf16>
    %97 = vector.shape_cast %96 : vector<1x128x384xbf16> to vector<128x384xbf16>
    %cst_81 = arith.constant dense<0.000000e+00> : vector<8x384xf32>
    %98 = tpu.matmul %95, %97, %cst_81 {dimension_numbers = #tpu.dot_dimension_numbers<[1], [0], [0], [1], [0, 0, 1, 1], [], []>} : vector<8x128xbf16>, vector<128x384xbf16>, vector<8x384xf32> -> vector<8x384xf32>
    %c0_82 = arith.constant 0 : index
    %c0_83 = arith.constant 0 : index
    %c0_84 = arith.constant 0 : index
    %99 = vector.load %arg6[%c0_82, %c0_83, %c0_84] : memref<2x1x384xf32, #tpu.memory_space<vmem>>, vector<1x1x384xf32>
    %100 = vector.shape_cast %99 : vector<1x1x384xf32> to vector<1x384xf32>
    %101 = vector.broadcast %100 : vector<1x384xf32> to vector<8x384xf32>
    %102 = arith.addf %98, %101 : vector<8x384xf32>
    %103 = vector.extract_strided_slice %102 {offsets = [0, 0], sizes = [8, 128], strides = [1, 1]} : vector<8x384xf32> to vector<8x128xf32>
    %104 = vector.extract_strided_slice %84 {offsets = [0, 0], sizes = [8, 128], strides = [1, 1]} : vector<8x384xf32> to vector<8x128xf32>
    %105 = arith.addf %103, %104 : vector<8x128xf32>
    %106 = arith.negf %105 : vector<8x128xf32>
    %107 = math.exp %106 : vector<8x128xf32>
    %cst_85 = arith.constant 1.000000e+00 : f32
    %108 = vector.broadcast %cst_85 : f32 to vector<8x128xf32>
    %109 = arith.addf %108, %107 : vector<8x128xf32>
    %110 = arith.divf %108, %109 : vector<8x128xf32>
    %111 = vector.extract_strided_slice %102 {offsets = [0, 128], sizes = [8, 128], strides = [1, 1]} : vector<8x384xf32> to vector<8x128xf32>
    %112 = vector.extract_strided_slice %84 {offsets = [0, 128], sizes = [8, 128], strides = [1, 1]} : vector<8x384xf32> to vector<8x128xf32>
    %113 = arith.addf %111, %112 : vector<8x128xf32>
    %114 = arith.negf %113 : vector<8x128xf32>
    %115 = math.exp %114 : vector<8x128xf32>
    %cst_86 = arith.constant 1.000000e+00 : f32
    %116 = vector.broadcast %cst_86 : f32 to vector<8x128xf32>
    %117 = arith.addf %116, %115 : vector<8x128xf32>
    %118 = arith.divf %116, %117 : vector<8x128xf32>
    %119 = vector.extract_strided_slice %102 {offsets = [0, 256], sizes = [8, 128], strides = [1, 1]} : vector<8x384xf32> to vector<8x128xf32>
    %120 = vector.extract_strided_slice %84 {offsets = [0, 256], sizes = [8, 128], strides = [1, 1]} : vector<8x384xf32> to vector<8x128xf32>
    %121 = arith.mulf %110, %120 : vector<8x128xf32>
    %122 = arith.addf %119, %121 : vector<8x128xf32>
    %123 = math.tanh %122 : vector<8x128xf32>
    %cst_87 = arith.constant 1.000000e+00 : f32
    %124 = vector.broadcast %cst_87 : f32 to vector<8x128xf32>
    %125 = arith.subf %124, %118 : vector<8x128xf32>
    %126 = arith.mulf %125, %123 : vector<8x128xf32>
    %127 = arith.mulf %118, %76 : vector<8x128xf32>
    %128 = arith.addf %126, %127 : vector<8x128xf32>
    %c0_88 = arith.constant 0 : index
    %c0_89 = arith.constant 0 : index
    %c0_90 = arith.constant 0 : index
    %129 = vector.load %arg11[%c0_88, %c0_89, %c0_90] : memref<2x8x128xf32, #tpu.memory_space<vmem>>, vector<1x8x128xf32>
    %130 = vector.shape_cast %129 : vector<1x8x128xf32> to vector<8x128xf32>
    %131 = vector.shape_cast %128 : vector<8x128xf32> to vector<1x8x128xf32>
    tpu.vector_store %arg11[%c0_88, %c0_89, %c0_90], %131 {strides = array<i32>} : memref<2x8x128xf32, #tpu.memory_space<vmem>>, vector<1x8x128xf32>,
    %132 = arith.truncf %128 : vector<8x128xf32> to vector<8x128xbf16>
    %c1_91 = arith.constant 1 : index
    %c0_92 = arith.constant 0 : index
    %c0_93 = arith.constant 0 : index
    %133 = vector.load %arg4[%c1_91, %c0_92, %c0_93] : memref<2x128x384xbf16, #tpu.memory_space<vmem>>, vector<1x128x384xbf16>
    %134 = vector.shape_cast %133 : vector<1x128x384xbf16> to vector<128x384xbf16>
    %cst_94 = arith.constant dense<0.000000e+00> : vector<8x384xf32>
    %135 = tpu.matmul %132, %134, %cst_94 {dimension_numbers = #tpu.dot_dimension_numbers<[1], [0], [0], [1], [0, 0, 1, 1], [], []>} : vector<8x128xbf16>, vector<128x384xbf16>, vector<8x384xf32> -> vector<8x384xf32>
    %c1_95 = arith.constant 1 : index
    %c0_96 = arith.constant 0 : index
    %c0_97 = arith.constant 0 : index
    %136 = vector.load %arg6[%c1_95, %c0_96, %c0_97] : memref<2x1x384xf32, #tpu.memory_space<vmem>>, vector<1x1x384xf32>
    %137 = vector.shape_cast %136 : vector<1x1x384xf32> to vector<1x384xf32>
    %138 = vector.broadcast %137 : vector<1x384xf32> to vector<8x384xf32>
    %139 = arith.addf %135, %138 : vector<8x384xf32>
    %140 = vector.extract_strided_slice %139 {offsets = [0, 0], sizes = [8, 128], strides = [1, 1]} : vector<8x384xf32> to vector<8x128xf32>
    %141 = vector.extract_strided_slice %94 {offsets = [0, 0], sizes = [8, 128], strides = [1, 1]} : vector<8x384xf32> to vector<8x128xf32>
    %142 = arith.addf %140, %141 : vector<8x128xf32>
    %143 = arith.negf %142 : vector<8x128xf32>
    %144 = math.exp %143 : vector<8x128xf32>
    %cst_98 = arith.constant 1.000000e+00 : f32
    %145 = vector.broadcast %cst_98 : f32 to vector<8x128xf32>
    %146 = arith.addf %145, %144 : vector<8x128xf32>
    %147 = arith.divf %145, %146 : vector<8x128xf32>
    %148 = vector.extract_strided_slice %139 {offsets = [0, 128], sizes = [8, 128], strides = [1, 1]} : vector<8x384xf32> to vector<8x128xf32>
    %149 = vector.extract_strided_slice %94 {offsets = [0, 128], sizes = [8, 128], strides = [1, 1]} : vector<8x384xf32> to vector<8x128xf32>
    %150 = arith.addf %148, %149 : vector<8x128xf32>
    %151 = arith.negf %150 : vector<8x128xf32>
    %152 = math.exp %151 : vector<8x128xf32>
    %cst_99 = arith.constant 1.000000e+00 : f32
    %153 = vector.broadcast %cst_99 : f32 to vector<8x128xf32>
    %154 = arith.addf %153, %152 : vector<8x128xf32>
    %155 = arith.divf %153, %154 : vector<8x128xf32>
    %156 = vector.extract_strided_slice %139 {offsets = [0, 256], sizes = [8, 128], strides = [1, 1]} : vector<8x384xf32> to vector<8x128xf32>
    %157 = vector.extract_strided_slice %94 {offsets = [0, 256], sizes = [8, 128], strides = [1, 1]} : vector<8x384xf32> to vector<8x128xf32>
    %158 = arith.mulf %147, %157 : vector<8x128xf32>
    %159 = arith.addf %156, %158 : vector<8x128xf32>
    %160 = math.tanh %159 : vector<8x128xf32>
    %cst_100 = arith.constant 1.000000e+00 : f32
    %161 = vector.broadcast %cst_100 : f32 to vector<8x128xf32>
    %162 = arith.subf %161, %155 : vector<8x128xf32>
    %163 = arith.mulf %162, %160 : vector<8x128xf32>
    %164 = arith.mulf %155, %86 : vector<8x128xf32>
    %165 = arith.addf %163, %164 : vector<8x128xf32>
    %c1_101 = arith.constant 1 : index
    %c0_102 = arith.constant 0 : index
    %c0_103 = arith.constant 0 : index
    %166 = vector.load %arg11[%c1_101, %c0_102, %c0_103] : memref<2x8x128xf32, #tpu.memory_space<vmem>>, vector<1x8x128xf32>
    %167 = vector.shape_cast %166 : vector<1x8x128xf32> to vector<8x128xf32>
    %168 = vector.shape_cast %165 : vector<8x128xf32> to vector<1x8x128xf32>
    tpu.vector_store %arg11[%c1_101, %c0_102, %c0_103], %168 {strides = array<i32>} : memref<2x8x128xf32, #tpu.memory_space<vmem>>, vector<1x8x128xf32>,
    %169 = arith.truncf %165 : vector<8x128xf32> to vector<8x128xbf16>
    %c0_104 = arith.constant 0 : index
    %c0_105 = arith.constant 0 : index
    %170 = vector.load %arg8[%c0_104, %c0_105] : memref<128x128xbf16, #tpu.memory_space<vmem>>, vector<128x128xbf16>
    %cst_106 = arith.constant dense<0.000000e+00> : vector<8x128xf32>
    %171 = tpu.matmul %169, %170, %cst_106 {dimension_numbers = #tpu.dot_dimension_numbers<[1], [0], [0], [1], [0, 0, 1, 1], [], []>} : vector<8x128xbf16>, vector<128x128xbf16>, vector<8x128xf32> -> vector<8x128xf32>
    %c0_107 = arith.constant 0 : index
    %c0_108 = arith.constant 0 : index
    %172 = vector.load %arg9[%c0_107, %c0_108] : memref<1x128xf32, #tpu.memory_space<vmem>>, vector<1x128xf32>
    %173 = vector.broadcast %172 : vector<1x128xf32> to vector<8x128xf32>
    %174 = arith.addf %171, %173 : vector<8x128xf32>
    %cst_109 = arith.constant dense<0xFF800000> : vector<8xf32>
    %175 = vector.multi_reduction <maximumf>, %174, %cst_109 [1] : vector<8x128xf32> to vector<8xf32>
    %176 = vector.shape_cast %175 : vector<8xf32> to vector<8x1xf32>
    %177 = vector.broadcast %176 : vector<8x1xf32> to vector<8x128xf32>
    %178 = arith.subf %174, %177 : vector<8x128xf32>
    %179 = math.exp %178 : vector<8x128xf32>
    %cst_110 = arith.constant dense<0.000000e+00> : vector<8xf32>
    %180 = vector.multi_reduction <add>, %179, %cst_110 [1] : vector<8x128xf32> to vector<8xf32>
    %181 = vector.shape_cast %180 : vector<8xf32> to vector<8x1xf32>
    %182 = math.log %181 : vector<8x1xf32>
    %183 = vector.broadcast %182 : vector<8x1xf32> to vector<8x128xf32>
    %184 = arith.subf %178, %183 : vector<8x128xf32>
    %c0_111 = arith.constant 0 : index
    %c0_112 = arith.constant 0 : index
    %185 = vector.load %arg10[%c0_111, %c0_112] : memref<8x128xf32, #tpu.memory_space<vmem>>, vector<8x128xf32>
    tpu.vector_store %arg10[%c0_111, %c0_112], %184 {strides = array<i32>} : memref<8x128xf32, #tpu.memory_space<vmem>>, vector<8x128xf32>,
    return
  }
  func.func @transform_1(%arg0: i32, %arg1: memref<8xi32, #tpu.memory_space<smem>>) -> (i32, i32, i32) {
    %c0_i32 = arith.constant 0 : i32
    %c0_i32_0 = arith.constant 0 : i32
    %c0_i32_1 = arith.constant 0 : i32
    %c0_i32_2 = arith.constant 0 : i32
    return %c0_i32, %c0_i32_0, %c0_i32_1 : i32, i32, i32
  }
  func.func @transform_2(%arg0: i32, %arg1: memref<8xi32, #tpu.memory_space<smem>>) -> (i32, i32, i32) {
    %c0_i32 = arith.constant 0 : i32
    %c0_i32_0 = arith.constant 0 : i32
    %c0_i32_1 = arith.constant 0 : i32
    %c0_i32_2 = arith.constant 0 : i32
    return %c0_i32, %c0_i32_0, %c0_i32_1 : i32, i32, i32
  }
  func.func @transform_3(%arg0: i32, %arg1: memref<8xi32, #tpu.memory_space<smem>>) -> (i32, i32, i32) {
    %c0_i32 = arith.constant 0 : i32
    %c0_i32_0 = arith.constant 0 : i32
    %c0_i32_1 = arith.constant 0 : i32
    %c0_i32_2 = arith.constant 0 : i32
    return %c0_i32, %c0_i32_0, %c0_i32_1 : i32, i32, i32
  }
  func.func @transform_4(%arg0: i32, %arg1: memref<8xi32, #tpu.memory_space<smem>>) -> (i32, i32, i32) {
    %c0_i32 = arith.constant 0 : i32
    %c0_i32_0 = arith.constant 0 : i32
    %c0_i32_1 = arith.constant 0 : i32
    %c0_i32_2 = arith.constant 0 : i32
    return %c0_i32, %c0_i32_0, %c0_i32_1 : i32, i32, i32
  }
  func.func @transform_5(%arg0: i32, %arg1: memref<8xi32, #tpu.memory_space<smem>>) -> (i32, i32, i32) {
    %c0_i32 = arith.constant 0 : i32
    %c0_i32_0 = arith.constant 0 : i32
    %c0_i32_1 = arith.constant 0 : i32
    %c0_i32_2 = arith.constant 0 : i32
    return %c0_i32, %c0_i32_0, %c0_i32_1 : i32, i32, i32
  }
  func.func @transform_6(%arg0: i32, %arg1: memref<8xi32, #tpu.memory_space<smem>>) -> (i32, i32) {
    %c0_i32 = arith.constant 0 : i32
    %c0_i32_0 = arith.constant 0 : i32
    %c0_i32_1 = arith.constant 0 : i32
    return %c0_i32, %c0_i32_0 : i32, i32
  }
  func.func @transform_7(%arg0: i32, %arg1: memref<8xi32, #tpu.memory_space<smem>>) -> (i32, i32) {
    %c0_i32 = arith.constant 0 : i32
    %c0_i32_0 = arith.constant 0 : i32
    %c0_i32_1 = arith.constant 0 : i32
    return %c0_i32, %c0_i32_0 : i32, i32
  }
  func.func @transform_8(%arg0: i32, %arg1: memref<8xi32, #tpu.memory_space<smem>>) -> (i32, i32) {
    %c0_i32 = arith.constant 0 : i32
    %c0_i32_0 = arith.constant 0 : i32
    %c0_i32_1 = arith.constant 0 : i32
    return %c0_i32, %c0_i32_0 : i32, i32
  }
  func.func @transform_9(%arg0: i32, %arg1: memref<8xi32, #tpu.memory_space<smem>>) -> (i32, i32, i32) {
    %c0_i32 = arith.constant 0 : i32
    %c0_i32_0 = arith.constant 0 : i32
    %c0_i32_1 = arith.constant 0 : i32
    %c0_i32_2 = arith.constant 0 : i32
    return %c0_i32, %c0_i32_0, %c0_i32_1 : i32, i32, i32
  }
}

</mosaic_0001>

<llo_original>
// kernel: tpu_custom_call.1
$region0: #{tpu_custom_call.1}
  #allocation0 [shape = 'u32[]', space=smem, size = 0x4, offset = 0x4, fixed_abs, tag = 'smem constant byte address 0x4 - core index']
  #allocation1 [shape = 'u32[72,128]{1,0:T(1,128)}', space=vmem, size = 0x9000, scoped, tag = 'internal scratch']
  #allocation2 [shape = 'f32[8,128]{1,0:T(8,128)}', space=vmem, size = 0x1000, scoped, tag = 'scratch operand']
  #allocation3 [shape = 's32[8]{0}', space=sflag, size = 0x20, scoped, tag = 'scratch operand']
  #allocation4 [shape = 's32[1]{0}', space=sflag, size = 0x4, scoped, tag = 'scoped memory for tpu_custom_call.1']
  #allocation5 [shape = 'u8[512]{0}', space=smem, size = 0x200, scoped, tag = 'prefetched SMEM operand 0']
  #allocation17 [shape = 's32[]', space=sflag, size = 0x4, offset = 0, fixed_abs, tag = 'sflag constant byte address 0x0 - dummy sync flag']
  #allocation18 [shape = 's32[]', space=sflag, size = 0x4, offset = 0, fixed_abs, tag = 'sflag constant byte address 0x0 - dummy sync flag']
  #allocation19 [shape = 'u32[]', space=smem, size = 0x4, offset = 0x44, fixed_abs, tag = 'smem constant byte address 0x44 - assertion arg 0']
  #allocation20 [shape = 'u32[]', space=smem, size = 0x4, offset = 0x48, fixed_abs, tag = 'smem constant byte address 0x48 - assertion arg 1']
  #allocation21 [shape = 's32[]', space=sflag, size = 0x4, offset = 0, fixed_abs, tag = 'sflag constant byte address 0x0 - dummy sync flag']
  #allocation22 [shape = 's32[]', space=sflag, size = 0x4, offset = 0, fixed_abs, tag = 'sflag constant byte address 0x0 - dummy sync flag']
  #allocation23 [shape = 's32[]', space=sflag, size = 0x4, offset = 0, fixed_abs, tag = 'sflag constant byte address 0x0 - dummy sync flag']
  #allocation24 [shape = 's32[]', space=sflag, size = 0x4, offset = 0, fixed_abs, tag = 'sflag constant byte address 0x0 - dummy sync flag']
  #allocation25 [shape = 's32[]', space=sflag, size = 0x4, offset = 0, fixed_abs, tag = 'sflag constant byte address 0x0 - dummy sync flag']
  #allocation26 [shape = 's32[]', space=sflag, size = 0x4, offset = 0, fixed_abs, tag = 'sflag constant byte address 0x0 - dummy sync flag']
  #allocation27 [shape = 's32[]', space=sflag, size = 0x4, offset = 0, fixed_abs, tag = 'sflag constant byte address 0x0 - dummy sync flag']
  #allocation28 [shape = 's32[]', space=sflag, size = 0x4, offset = 0, fixed_abs, tag = 'sflag constant byte address 0x0 - dummy sync flag']
  #allocation29 [shape = 's32[]', space=sflag, size = 0x4, offset = 0, fixed_abs, tag = 'sflag constant byte address 0x0 - dummy sync flag']
  #allocation30 [shape = 's32[]', space=sflag, size = 0x4, offset = 0, fixed_abs, tag = 'sflag constant byte address 0x0 - dummy sync flag']
  #allocation31 [shape = 's32[]', space=sflag, size = 0x4, offset = 0, fixed_abs, tag = 'sflag constant byte address 0x0 - dummy sync flag']
  #allocation32 [shape = 's32[]', space=sflag, size = 0x4, offset = 0, fixed_abs, tag = 'sflag constant byte address 0x0 - dummy sync flag']
  #allocation33 [shape = 's32[]', space=sflag, size = 0x4, offset = 0, fixed_abs, tag = 'sflag constant byte address 0x0 - dummy sync flag']
  #allocation34 [shape = 's32[]', space=sflag, size = 0x4, offset = 0, fixed_abs, tag = 'sflag constant byte address 0x0 - dummy sync flag']
  %s0 = inlined_call_operand.vmem [shape: s32[8], index: 0, kind: input, shape index: {}]
  %s1 = inlined_call_operand.hbm [shape: f32[64,128], index: 1, kind: input, shape index: {}]
  %s2 = inlined_call_operand.hbm [shape: f32[2,8,128], index: 2, kind: input, shape index: {}, may-alias: {2,10}]
  %s3 = inlined_call_operand.hbm [shape: bf16[2,128,384], index: 3, kind: input, shape index: {}]
  %s4 = inlined_call_operand.hbm [shape: bf16[2,128,384], index: 4, kind: input, shape index: {}]
  %s5 = inlined_call_operand.vmem [shape: f32[2,1,384], index: 5, kind: input, shape index: {}]
  %s6 = inlined_call_operand.vmem [shape: f32[2,1,384], index: 6, kind: input, shape index: {}]
  %s7 = inlined_call_operand.hbm [shape: bf16[128,128], index: 7, kind: input, shape index: {}]
  %s8 = inlined_call_operand.vmem [shape: f32[1,128], index: 8, kind: input, shape index: {}]
  %s9 = inlined_call_operand.hbm [shape: f32[8,128], index: 9, kind: output, shape index: {0}]
  %s10 = inlined_call_operand.hbm [shape: f32[2,8,128], index: 10, kind: output, shape index: {1}, may-alias: {2,10}]
  %11 = xla_tuple %s9, %s10
  %s12 = sld [smem:[#allocation0]]
  $region94: #{tpu_custom_call.1} parent=0
    _
  %s14 = ssub.s32 1, %s12
  %s15 = scalar_select 0, %s14, %s12
  %s17 = sshll.u32 %s0, 4
  %s18 = int_to_ptr.vmem [resolvable:$true] %s17
  %20 = dma.vmem_to_smem %s18, 16, [#allocation5], [#allocation4]
  %22 = dma.done [#allocation4], 16
  %23 = sfence
  $region1: #{tpu_custom_call.1} parent=0
    #allocation6 [shape = 'u8[8192]{0}', space=vmem, size = 0x2000, scoped, tag = 'input window, operand 2, single buffered']
    #allocation7 [shape = 's32[1]{0}', space=sflag, size = 0x4, scoped, tag = 'scoped memory for tpu_custom_call.1']
    #allocation8 [shape = 's32[1]{0}', space=sflag, size = 0x4, scoped, tag = 'scoped memory for tpu_custom_call.1']
    #allocation9 [shape = 'u8[196608]{0}', space=vmem, size = 0x30000, scoped, tag = 'input window, operand 3, single buffered']
    #allocation10 [shape = 's32[1]{0}', space=sflag, size = 0x4, scoped, tag = 'scoped memory for tpu_custom_call.1']
    #allocation11 [shape = 'u8[196608]{0}', space=vmem, size = 0x30000, scoped, tag = 'input window, operand 4, single buffered']
    #allocation12 [shape = 'u8[32768]{0}', space=vmem, size = 0x8000, scoped, tag = 'input window, operand 7, single buffered']
    #allocation13 [shape = 's32[1]{0}', space=sflag, size = 0x4, scoped, tag = 'scoped memory for tpu_custom_call.1']
    #allocation14 [shape = 'u8[4096]{0}', space=vmem, size = 0x1000, scoped, tag = 'output window, operand 0, single buffered']
    #allocation15 [shape = 'u8[8192]{0}', space=vmem, size = 0x2000, scoped, tag = 'output window, operand 1, single buffered']
    #allocation16 [shape = 's32[1]{0}', space=sflag, size = 0x4, scoped, tag = 'scoped memory for tpu_custom_call.1']
    %24 = vsyncpa [#allocation7], 0
    %25 = vsyncpa [#allocation10], 0
    %26 = vsyncpa [#allocation13], 0
    %27 = vsyncpa [#allocation8], 0
    %28 = vsyncpa [#allocation16], 0
    // Predicated region
    $region2: #{tpu_custom_call.1} parent=1 // pred_check
      _
    $region3: #{tpu_custom_call.1} parent=1 // pred_check_branch
      %30 = sbr.rel (0) target = $region5
    $region4: #{tpu_custom_call.1} parent=1 // pred_region
      %32 = vsyncadd [#allocation7], 0
      %s33 = sshll.u32 %s2, 4
      %s34 = int_to_ptr.hbm [resolvable:$true] %s33
      %s35 = sshll.u32 [#allocation6], 4
      %s36 = int_to_ptr.vmem [resolvable:$true] %s35
      %41 = dma.hbm_to_vmem [thread:$0]  %s34, 256, %s36, [#allocation7], 128, 128, 8
    $region5: #{tpu_custom_call.1} parent=1 // pred_fallthru
      _
    // Predicated region
    $region6: #{tpu_custom_call.1} parent=1 // pred_check
      _
    $region7: #{tpu_custom_call.1} parent=1 // pred_check_branch
      %43 = sbr.rel (0) target = $region9
    $region8: #{tpu_custom_call.1} parent=1 // pred_region
      %45 = vsyncadd [#allocation10], 0
      %s46 = sshll.u32 %s3, 4
      %s47 = int_to_ptr.hbm [resolvable:$true] %s46
      %s48 = sshll.u32 [#allocation9], 4
      %s49 = int_to_ptr.vmem [resolvable:$true] %s48
      %54 = dma.hbm_to_vmem [thread:$0]  %s47, 6144, %s49, [#allocation10], 192, 192, 12
    $region9: #{tpu_custom_call.1} parent=1 // pred_fallthru
      _
    // Predicated region
    $region10: #{tpu_custom_call.1} parent=1 // pred_check
      _
    $region11: #{tpu_custom_call.1} parent=1 // pred_check_branch
      %56 = sbr.rel (0) target = $region13
    $region12: #{tpu_custom_call.1} parent=1 // pred_region
      %58 = vsyncadd [#allocation10], 0
      %s59 = sshll.u32 %s4, 4
      %s60 = int_to_ptr.hbm [resolvable:$true] %s59
      %s61 = sshll.u32 [#allocation11], 4
      %s62 = int_to_ptr.vmem [resolvable:$true] %s61
      %67 = dma.hbm_to_vmem [thread:$0]  %s60, 6144, %s62, [#allocation10], 192, 192, 12
    $region13: #{tpu_custom_call.1} parent=1 // pred_fallthru
      _
    // Predicated region
    $region14: #{tpu_custom_call.1} parent=1 // pred_check
      _
    $region15: #{tpu_custom_call.1} parent=1 // pred_check_branch
      %69 = sbr.rel (0) target = $region17
    $region16: #{tpu_custom_call.1} parent=1 // pred_region
      _
    $region17: #{tpu_custom_call.1} parent=1 // pred_fallthru
      _
    // Predicated region
    $region18: #{tpu_custom_call.1} parent=1 // pred_check
      _
    $region19: #{tpu_custom_call.1} parent=1 // pred_check_branch
      %71 = sbr.rel (0) target = $region21
    $region20: #{tpu_custom_call.1} parent=1 // pred_region
      _
    $region21: #{tpu_custom_call.1} parent=1 // pred_fallthru
      _
    // Predicated region
    $region22: #{tpu_custom_call.1} parent=1 // pred_check
      _
    $region23: #{tpu_custom_call.1} parent=1 // pred_check_branch
      %73 = sbr.rel (0) target = $region25
    $region24: #{tpu_custom_call.1} parent=1 // pred_region
      %75 = vsyncadd [#allocation13], 0
      %s76 = sshll.u32 %s7, 4
      %s77 = int_to_ptr.hbm [resolvable:$true] %s76
      %s78 = sshll.u32 [#allocation12], 4
      %s79 = int_to_ptr.vmem [resolvable:$true] %s78
      %84 = dma.hbm_to_vmem [thread:$0]  %s77, 1024, %s79, [#allocation13], 64, 64, 4
    $region25: #{tpu_custom_call.1} parent=1 // pred_fallthru
      _
    // Predicated region
    $region26: #{tpu_custom_call.1} parent=1 // pred_check
      _
    $region27: #{tpu_custom_call.1} parent=1 // pred_check_branch
      %86 = sbr.rel (0) target = $region29
    $region28: #{tpu_custom_call.1} parent=1 // pred_region
      _
    $region29: #{tpu_custom_call.1} parent=1 // pred_fallthru
      _
    // Predicated region
    $region30: #{tpu_custom_call.1} parent=1 // pred_check
      _
    $region31: #{tpu_custom_call.1} parent=1 // pred_check_branch
      %88 = sbr.rel (0) target = $region33
    $region32: #{tpu_custom_call.1} parent=1 // pred_region
      %90 = dma.done [#allocation7], 256
    $region33: #{tpu_custom_call.1} parent=1 // pred_fallthru
      _
    // Predicated region
    $region34: #{tpu_custom_call.1} parent=1 // pred_check
      _
    $region35: #{tpu_custom_call.1} parent=1 // pred_check_branch
      %92 = sbr.rel (0) target = $region37
    $region36: #{tpu_custom_call.1} parent=1 // pred_region
      %94 = dma.done [#allocation10], 6144
    $region37: #{tpu_custom_call.1} parent=1 // pred_fallthru
      _
    // Predicated region
    $region38: #{tpu_custom_call.1} parent=1 // pred_check
      _
    $region39: #{tpu_custom_call.1} parent=1 // pred_check_branch
      %96 = sbr.rel (0) target = $region41
    $region40: #{tpu_custom_call.1} parent=1 // pred_region
      %98 = dma.done [#allocation10], 6144
    $region41: #{tpu_custom_call.1} parent=1 // pred_fallthru
      _
    // Predicated region
    $region42: #{tpu_custom_call.1} parent=1 // pred_check
      _
    $region43: #{tpu_custom_call.1} parent=1 // pred_check_branch
      %100 = sbr.rel (0) target = $region45
    $region44: #{tpu_custom_call.1} parent=1 // pred_region
      %102 = dma.done [#allocation13], 1024
    $region45: #{tpu_custom_call.1} parent=1 // pred_fallthru
      _
    %s103 = sld [smem:[#allocation5]]
    %s104 = scalar_lea.hbm %s1, %s103
    // Predicated region
    $region46: #{tpu_custom_call.1} parent=1 // pred_check
      _
    $region47: #{tpu_custom_call.1} parent=1 // pred_check_branch
      %106 = sbr.rel target = $region49
    $region48: #{tpu_custom_call.1} parent=1 // pred_region
      %107 = sst [smem:[#allocation19]] [#allocation18]
      %108 = sst [smem:[#allocation20]] [#allocation17]
    $region49: #{tpu_custom_call.1} parent=1 // pred_fallthru
      _
    %110 = shalt.err (0)
    %s112 = sshll.u32 %s104, 4
    %s113 = int_to_ptr.hbm [resolvable:$true] %s112
    %s114 = sshll.u32 [#allocation2], 4
    %s115 = int_to_ptr.vmem [resolvable:$true] %s114
    %117 = dma.hbm_to_vmem [thread:$0]  %s113, 16, %s115, [#allocation3]
    %s118 = sld [smem:[#allocation5 + $0x1]]
    %s119 = scalar_lea.hbm %s1, %s118
    %s120 = scalar_lea.vmem [#allocation2], 1
    %s121 = scalar_lea.sflag [#allocation3], 1
    // Predicated region
    $region50: #{tpu_custom_call.1} parent=1 // pred_check
      _
    $region51: #{tpu_custom_call.1} parent=1 // pred_check_branch
      %123 = sbr.rel target = $region53
    $region52: #{tpu_custom_call.1} parent=1 // pred_region
      %124 = sst [smem:[#allocation19]] [#allocation22]
      %125 = sst [smem:[#allocation20]] [#allocation21]
    $region53: #{tpu_custom_call.1} parent=1 // pred_fallthru
      _
    %127 = shalt.err (0)
    %s129 = sshll.u32 %s119, 4
    %s130 = int_to_ptr.hbm [resolvable:$true] %s129
    %s131 = sshll.u32 %s120, 4
    %s132 = int_to_ptr.vmem [resolvable:$true] %s131
    %134 = dma.hbm_to_vmem [thread:$0]  %s130, 16, %s132, %s121
    %s135 = sld [smem:[#allocation5 + $0x2]]
    %s136 = scalar_lea.hbm %s1, %s135
    %s137 = scalar_lea.vmem [#allocation2], 2
    %s138 = scalar_lea.sflag [#allocation3], 2
    // Predicated region
    $region54: #{tpu_custom_call.1} parent=1 // pred_check
      _
    $region55: #{tpu_custom_call.1} parent=1 // pred_check_branch
      %140 = sbr.rel target = $region57
    $region56: #{tpu_custom_call.1} parent=1 // pred_region
      %141 = sst [smem:[#allocation19]] [#allocation24]
      %142 = sst [smem:[#allocation20]] [#allocation23]
    $region57: #{tpu_custom_call.1} parent=1 // pred_fallthru
      _
    %144 = shalt.err (0)
    %s146 = sshll.u32 %s136, 4
    %s147 = int_to_ptr.hbm [resolvable:$true] %s146
    %s148 = sshll.u32 %s137, 4
    %s149 = int_to_ptr.vmem [resolvable:$true] %s148
    %151 = dma.hbm_to_vmem [thread:$0]  %s147, 16, %s149, %s138
    %s152 = sld [smem:[#allocation5 + $0x3]]
    %s153 = scalar_lea.hbm %s1, %s152
    %s154 = scalar_lea.vmem [#allocation2], 3
    %s155 = scalar_lea.sflag [#allocation3], 3
    // Predicated region
    $region58: #{tpu_custom_call.1} parent=1 // pred_check
      _
    $region59: #{tpu_custom_call.1} parent=1 // pred_check_branch
      %157 = sbr.rel target = $region61
    $region60: #{tpu_custom_call.1} parent=1 // pred_region
      %158 = sst [smem:[#allocation19]] [#allocation26]
      %159 = sst [smem:[#allocation20]] [#allocation25]
    $region61: #{tpu_custom_call.1} parent=1 // pred_fallthru
      _
    %161 = shalt.err (0)
    %s163 = sshll.u32 %s153, 4
    %s164 = int_to_ptr.hbm [resolvable:$true] %s163
    %s165 = sshll.u32 %s154, 4
    %s166 = int_to_ptr.vmem [resolvable:$true] %s165
    %168 = dma.hbm_to_vmem [thread:$0]  %s164, 16, %s166, %s155
    %s169 = sld [smem:[#allocation5 + $0x4]]
    %s170 = scalar_lea.hbm %s1, %s169
    %s171 = scalar_lea.vmem [#allocation2], 4
    %s172 = scalar_lea.sflag [#allocation3], 4
    // Predicated region
    $region62: #{tpu_custom_call.1} parent=1 // pred_check
      _
    $region63: #{tpu_custom_call.1} parent=1 // pred_check_branch
      %174 = sbr.rel target = $region65
    $region64: #{tpu_custom_call.1} parent=1 // pred_region
      %175 = sst [smem:[#allocation19]] [#allocation28]
      %176 = sst [smem:[#allocation20]] [#allocation27]
    $region65: #{tpu_custom_call.1} parent=1 // pred_fallthru
      _
    %178 = shalt.err (0)
    %s180 = sshll.u32 %s170, 4
    %s181 = int_to_ptr.hbm [resolvable:$true] %s180
    %s182 = sshll.u32 %s171, 4
    %s183 = int_to_ptr.vmem [resolvable:$true] %s182
    %185 = dma.hbm_to_vmem [thread:$0]  %s181, 16, %s183, %s172
    %s186 = sld [smem:[#allocation5 + $0x5]]
    %s187 = scalar_lea.hbm %s1, %s186
    %s188 = scalar_lea.vmem [#allocation2], 5
    %s189 = scalar_lea.sflag [#allocation3], 5
    // Predicated region
    $region66: #{tpu_custom_call.1} parent=1 // pred_check
      _
    $region67: #{tpu_custom_call.1} parent=1 // pred_check_branch
      %191 = sbr.rel target = $region69
    $region68: #{tpu_custom_call.1} parent=1 // pred_region
      %192 = sst [smem:[#allocation19]] [#allocation30]
      %193 = sst [smem:[#allocation20]] [#allocation29]
    $region69: #{tpu_custom_call.1} parent=1 // pred_fallthru
      _
    %195 = shalt.err (0)
    %s197 = sshll.u32 %s187, 4
    %s198 = int_to_ptr.hbm [resolvable:$true] %s197
    %s199 = sshll.u32 %s188, 4
    %s200 = int_to_ptr.vmem [resolvable:$true] %s199
    %202 = dma.hbm_to_vmem [thread:$0]  %s198, 16, %s200, %s189
    %s203 = sld [smem:[#allocation5 + $0x6]]
    %s204 = scalar_lea.hbm %s1, %s203
    %s205 = scalar_lea.vmem [#allocation2], 6
    %s206 = scalar_lea.sflag [#allocation3], 6
    // Predicated region
    $region70: #{tpu_custom_call.1} parent=1 // pred_check
      _
    $region71: #{tpu_custom_call.1} parent=1 // pred_check_branch
      %208 = sbr.rel target = $region73
    $region72: #{tpu_custom_call.1} parent=1 // pred_region
      %209 = sst [smem:[#allocation19]] [#allocation32]
      %210 = sst [smem:[#allocation20]] [#allocation31]
    $region73: #{tpu_custom_call.1} parent=1 // pred_fallthru
      _
    %212 = shalt.err (0)
    %s214 = sshll.u32 %s204, 4
    %s215 = int_to_ptr.hbm [resolvable:$true] %s214
    %s216 = sshll.u32 %s205, 4
    %s217 = int_to_ptr.vmem [resolvable:$true] %s216
    %219 = dma.hbm_to_vmem [thread:$0]  %s215, 16, %s217, %s206
    %s220 = sld [smem:[#allocation5 + $0x7]]
    %s221 = scalar_lea.hbm %s1, %s220
    %s222 = scalar_lea.vmem [#allocation2], 7
    %s223 = scalar_lea.sflag [#allocation3], 7
    // Predicated region
    $region74: #{tpu_custom_call.1} parent=1 // pred_check
      _
    $region75: #{tpu_custom_call.1} parent=1 // pred_check_branch
      %225 = sbr.rel target = $region77
    $region76: #{tpu_custom_call.1} parent=1 // pred_region
      %226 = sst [smem:[#allocation19]] [#allocation34]
      %227 = sst [smem:[#allocation20]] [#allocation33]
    $region77: #{tpu_custom_call.1} parent=1 // pred_fallthru
      _
    %229 = shalt.err (0)
    %s231 = sshll.u32 %s221, 4
    %s232 = int_to_ptr.hbm [resolvable:$true] %s231
    %s233 = sshll.u32 %s222, 4
    %s234 = int_to_ptr.vmem [resolvable:$true] %s233
    %236 = dma.hbm_to_vmem [thread:$0]  %s232, 16, %s234, %s223
    %s237 = smul.u32 1, 1
    %s238 = sshll.u32 %s237, 4
    %239 = dma.done [#allocation3], %s238
    %s240 = sshll.u32 %s237, 4
    %241 = dma.done %s121, %s240
    %s242 = sshll.u32 %s237, 4
    %243 = dma.done %s138, %s242
    %s244 = sshll.u32 %s237, 4
    %245 = dma.done %s155, %s244
    %s246 = sshll.u32 %s237, 4
    %247 = dma.done %s172, %s246
    %s248 = sshll.u32 %s237, 4
    %249 = dma.done %s189, %s248
    %s250 = sshll.u32 %s237, 4
    %251 = dma.done %s206, %s250
    %s252 = sshll.u32 %s237, 4
    %253 = dma.done %s223, %s252
    %v254 = vld [vmem:[#allocation2] sm:$0xff]
    %v255 = vmax.f32 %v254, 0.0
    %v256 = vld [vmem:[#allocation6] sm:$0xff]
    %v257 = vpack.c.bf16 %v256, %v256
    %v258 = vld [vmem:[#allocation11] sm:$0xff]
    %v259 = vld [vmem:[#allocation11 + $0x8] sm:$0xf]
    %v260 = vld [vmem:[#allocation11 + $0xc] sm:$0xff]
    %v261 = vld [vmem:[#allocation11 + $0x14] sm:$0xf]
    %v262 = vld [vmem:[#allocation11 + $0x18] sm:$0xff]
    %v263 = vld [vmem:[#allocation11 + $0x20] sm:$0xf]
    %v264 = vld [vmem:[#allocation11 + $0x24] sm:$0xff]
    %v265 = vld [vmem:[#allocation11 + $0x2c] sm:$0xf]
    %v266 = vld [vmem:[#allocation11 + $0x30] sm:$0xff]
    %v267 = vld [vmem:[#allocation11 + $0x38] sm:$0xf]
    %v268 = vld [vmem:[#allocation11 + $0x3c] sm:$0xff]
    %v269 = vld [vmem:[#allocation11 + $0x44] sm:$0xf]
    %v270 = vld [vmem:[#allocation11 + $0x48] sm:$0xff]
    %v271 = vld [vmem:[#allocation11 + $0x50] sm:$0xf]
    %v272 = vld [vmem:[#allocation11 + $0x54] sm:$0xff]
    %v273 = vld [vmem:[#allocation11 + $0x5c] sm:$0xf]
    %v274 = vld [vmem:[#allocation11 + $0x60] sm:$0xff]
    %v275 = vld [vmem:[#allocation11 + $0x68] sm:$0xf]
    %v276 = vld [vmem:[#allocation11 + $0x6c] sm:$0xff]
    %v277 = vld [vmem:[#allocation11 + $0x74] sm:$0xf]
    %v278 = vld [vmem:[#allocation11 + $0x78] sm:$0xff]
    %v279 = vld [vmem:[#allocation11 + $0x80] sm:$0xf]
    %v280 = vld [vmem:[#allocation11 + $0x84] sm:$0xff]
    %v281 = vld [vmem:[#allocation11 + $0x8c] sm:$0xf]
    %v282 = vld [vmem:[#allocation11 + $0x90] sm:$0xff]
    %v283 = vld [vmem:[#allocation11 + $0x98] sm:$0xf]
    %v284 = vld [vmem:[#allocation11 + $0x9c] sm:$0xff]
    %v285 = vld [vmem:[#allocation11 + $0xa4] sm:$0xf]
    %v286 = vld [vmem:[#allocation11 + $0xa8] sm:$0xff]
    %v287 = vld [vmem:[#allocation11 + $0xb0] sm:$0xf]
    %v288 = vld [vmem:[#allocation11 + $0xb4] sm:$0xff]
    %v289 = vld [vmem:[#allocation11 + $0xbc] sm:$0xf]
    %v290 = vld [vmem:[%s6] sm:$0x7]
    %v292 = vperm.slane %v290, 0
    %v293 = vperm.slane %v290, 1
    %v294 = vperm.slane %v290, 2
    %v330 = vunpack.c.l.b16 %v258
    %v331 = vunpack.c.h.b16 %v258
    %v332 = vunpack.c.l.b16 %v259
    %v333 = vunpack.c.l.b16 %v260
    %v334 = vunpack.c.h.b16 %v260
    %v335 = vunpack.c.l.b16 %v261
    %v336 = vunpack.c.l.b16 %v262
    %v337 = vunpack.c.h.b16 %v262
    %v338 = vunpack.c.l.b16 %v263
    %v339 = vunpack.c.l.b16 %v264
    %v340 = vunpack.c.h.b16 %v264
    %v341 = vunpack.c.l.b16 %v265
    %v342 = vunpack.c.l.b16 %v266
    %v343 = vunpack.c.h.b16 %v266
    %v344 = vunpack.c.l.b16 %v267
    %v345 = vunpack.c.l.b16 %v268
    %v346 = vunpack.c.h.b16 %v268
    %v347 = vunpack.c.l.b16 %v269
    %v348 = vunpack.c.l.b16 %v270
    %v349 = vunpack.c.h.b16 %v270
    %v350 = vunpack.c.l.b16 %v271
    %v351 = vunpack.c.l.b16 %v272
    %v352 = vunpack.c.h.b16 %v272
    %v353 = vunpack.c.l.b16 %v273
    %v354 = vunpack.c.l.b16 %v274
    %v355 = vunpack.c.h.b16 %v274
    %v356 = vunpack.c.l.b16 %v275
    %v357 = vunpack.c.l.b16 %v276
    %v358 = vunpack.c.h.b16 %v276
    %v359 = vunpack.c.l.b16 %v277
    %v360 = vunpack.c.l.b16 %v278
    %v361 = vunpack.c.h.b16 %v278
    %v362 = vunpack.c.l.b16 %v279
    %v363 = vunpack.c.l.b16 %v280
    %v364 = vunpack.c.h.b16 %v280
    %v365 = vunpack.c.l.b16 %v281
    %v366 = vunpack.c.l.b16 %v282
    %v367 = vunpack.c.h.b16 %v282
    %v368 = vunpack.c.l.b16 %v283
    %v369 = vunpack.c.l.b16 %v284
    %v370 = vunpack.c.h.b16 %v284
    %v371 = vunpack.c.l.b16 %v285
    %v372 = vunpack.c.l.b16 %v286
    %v373 = vunpack.c.h.b16 %v286
    %v374 = vunpack.c.l.b16 %v287
    %v375 = vunpack.c.l.b16 %v288
    %v376 = vunpack.c.h.b16 %v288
    %v377 = vunpack.c.l.b16 %v289
    %v378 = vpack.c.b16 %v333, %v330
    %v379 = vpack.c.b16 %v334, %v331
    %v380 = vpack.c.b16 %v335, %v332
    %v381 = vpack.c.b16 %v339, %v336
    %v382 = vpack.c.b16 %v340, %v337
    %v383 = vpack.c.b16 %v341, %v338
    %v384 = vpack.c.b16 %v345, %v342
    %v385 = vpack.c.b16 %v346, %v343
    %v386 = vpack.c.b16 %v347, %v344
    %v387 = vpack.c.b16 %v351, %v348
    %v388 = vpack.c.b16 %v352, %v349
    %v389 = vpack.c.b16 %v353, %v350
    %v390 = vpack.c.b16 %v357, %v354
    %v391 = vpack.c.b16 %v358, %v355
    %v392 = vpack.c.b16 %v359, %v356
    %v393 = vpack.c.b16 %v363, %v360
    %v394 = vpack.c.b16 %v364, %v361
    %v395 = vpack.c.b16 %v365, %v362
    %v396 = vpack.c.b16 %v369, %v366
    %v397 = vpack.c.b16 %v370, %v367
    %v398 = vpack.c.b16 %v371, %v368
    %v399 = vpack.c.b16 %v375, %v372
    %v400 = vpack.c.b16 %v376, %v373
    %v401 = vpack.c.b16 %v377, %v374
    %426 = vmatpush.bf16.msra.mxu0 %v399
    %427 = vmatpush.bf16.msra.mxu0 %v396
    %428 = vmatpush.bf16.msra.mxu0 %v393
    %429 = vmatpush.bf16.msra.mxu0 %v390
    %430 = vmatpush.bf16.msra.mxu0 %v387
    %431 = vmatpush.bf16.msra.mxu0 %v384
    %432 = vmatpush.bf16.msra.mxu0 %v381
    %433 = vmatpush.bf16.msra.mxu0 %v378
    %434 = vmatmul.bf16.gmra.mxu0 %v257
    %v435 = vpop.f32.mrf.mxu0
    %v436 = vadd.f32 %v292, %v435
    %v437 = vpop.f32.mrf.mxu0
    %438 = vdwg.mxu0
    %439 = vmatpush.bf16.msra.mxu0 %v400
    %440 = vmatpush.bf16.msra.mxu0 %v397
    %441 = vmatpush.bf16.msra.mxu0 %v394
    %442 = vmatpush.bf16.msra.mxu0 %v391
    %443 = vmatpush.bf16.msra.mxu0 %v388
    %444 = vmatpush.bf16.msra.mxu0 %v385
    %445 = vmatpush.bf16.msra.mxu0 %v382
    %446 = vmatpush.bf16.msra.mxu0 %v379
    %447 = vmatmul.bf16.gmra.mxu0 %v257
    %v448 = vpop.f32.mrf.mxu0
    %v449 = vadd.f32 %v293, %v448
    %v450 = vpop.f32.mrf.mxu0
    %451 = vdwg.mxu0
    %452 = vmatpush.bf16.msra.mxu0 %v401
    %453 = vmatpush.bf16.msra.mxu0 %v398
    %454 = vmatpush.bf16.msra.mxu0 %v395
    %455 = vmatpush.bf16.msra.mxu0 %v392
    %456 = vmatpush.bf16.msra.mxu0 %v389
    %457 = vmatpush.bf16.msra.mxu0 %v386
    %458 = vmatpush.bf16.msra.mxu0 %v383
    %459 = vmatpush.bf16.msra.mxu0 %v380
    %460 = vmatmul.bf16.gmra.mxu0 %v257
    %v461 = vpop.f32.mrf.mxu0
    %v462 = vadd.f32 %v294, %v461
    %v463 = vpop.f32.mrf.mxu0
    %464 = vdwg.mxu0
    %s465 = scalar_lea.vmem [#allocation6], 8
    %v466 = vld [vmem:[%s465] sm:$0xff]
    %v467 = vpack.c.bf16 %v466, %v466
    %s468 = scalar_lea.vmem [#allocation11], 192
    %v469 = vld [vmem:[%s468] sm:$0xff]
    %v470 = vld [vmem:[%s468 + $0x8] sm:$0xf]
    %v471 = vld [vmem:[%s468 + $0xc] sm:$0xff]
    %v472 = vld [vmem:[%s468 + $0x14] sm:$0xf]
    %v473 = vld [vmem:[%s468 + $0x18] sm:$0xff]
    %v474 = vld [vmem:[%s468 + $0x20] sm:$0xf]
    %v475 = vld [vmem:[%s468 + $0x24] sm:$0xff]
    %v476 = vld [vmem:[%s468 + $0x2c] sm:$0xf]
    %v477 = vld [vmem:[%s468 + $0x30] sm:$0xff]
    %v478 = vld [vmem:[%s468 + $0x38] sm:$0xf]
    %v479 = vld [vmem:[%s468 + $0x3c] sm:$0xff]
    %v480 = vld [vmem:[%s468 + $0x44] sm:$0xf]
    %v481 = vld [vmem:[%s468 + $0x48] sm:$0xff]
    %v482 = vld [vmem:[%s468 + $0x50] sm:$0xf]
    %v483 = vld [vmem:[%s468 + $0x54] sm:$0xff]
    %v484 = vld [vmem:[%s468 + $0x5c] sm:$0xf]
    %v485 = vld [vmem:[%s468 + $0x60] sm:$0xff]
    %v486 = vld [vmem:[%s468 + $0x68] sm:$0xf]
    %v487 = vld [vmem:[%s468 + $0x6c] sm:$0xff]
    %v488 = vld [vmem:[%s468 + $0x74] sm:$0xf]
    %v489 = vld [vmem:[%s468 + $0x78] sm:$0xff]
    %v490 = vld [vmem:[%s468 + $0x80] sm:$0xf]
    %v491 = vld [vmem:[%s468 + $0x84] sm:$0xff]
    %v492 = vld [vmem:[%s468 + $0x8c] sm:$0xf]
    %v493 = vld [vmem:[%s468 + $0x90] sm:$0xff]
    %v494 = vld [vmem:[%s468 + $0x98] sm:$0xf]
    %v495 = vld [vmem:[%s468 + $0x9c] sm:$0xff]
    %v496 = vld [vmem:[%s468 + $0xa4] sm:$0xf]
    %v497 = vld [vmem:[%s468 + $0xa8] sm:$0xff]
    %v498 = vld [vmem:[%s468 + $0xb0] sm:$0xf]
    %v499 = vld [vmem:[%s468 + $0xb4] sm:$0xff]
    %v500 = vld [vmem:[%s468 + $0xbc] sm:$0xf]
    %s501 = scalar_lea.vmem %s6, 3
    %v502 = vld [vmem:[%s501] sm:$0x7]
    %v504 = vperm.slane %v502, 0
    %v505 = vperm.slane %v502, 1
    %v506 = vperm.slane %v502, 2
    %v542 = vunpack.c.l.b16 %v469
    %v543 = vunpack.c.h.b16 %v469
    %v544 = vunpack.c.l.b16 %v470
    %v545 = vunpack.c.l.b16 %v471
    %v546 = vunpack.c.h.b16 %v471
    %v547 = vunpack.c.l.b16 %v472
    %v548 = vunpack.c.l.b16 %v473
    %v549 = vunpack.c.h.b16 %v473
    %v550 = vunpack.c.l.b16 %v474
    %v551 = vunpack.c.l.b16 %v475
    %v552 = vunpack.c.h.b16 %v475
    %v553 = vunpack.c.l.b16 %v476
    %v554 = vunpack.c.l.b16 %v477
    %v555 = vunpack.c.h.b16 %v477
    %v556 = vunpack.c.l.b16 %v478
    %v557 = vunpack.c.l.b16 %v479
    %v558 = vunpack.c.h.b16 %v479
    %v559 = vunpack.c.l.b16 %v480
    %v560 = vunpack.c.l.b16 %v481
    %v561 = vunpack.c.h.b16 %v481
    %v562 = vunpack.c.l.b16 %v482
    %v563 = vunpack.c.l.b16 %v483
    %v564 = vunpack.c.h.b16 %v483
    %v565 = vunpack.c.l.b16 %v484
    %v566 = vunpack.c.l.b16 %v485
    %v567 = vunpack.c.h.b16 %v485
    %v568 = vunpack.c.l.b16 %v486
    %v569 = vunpack.c.l.b16 %v487
    %v570 = vunpack.c.h.b16 %v487
    %v571 = vunpack.c.l.b16 %v488
    %v572 = vunpack.c.l.b16 %v489
    %v573 = vunpack.c.h.b16 %v489
    %v574 = vunpack.c.l.b16 %v490
    %v575 = vunpack.c.l.b16 %v491
    %v576 = vunpack.c.h.b16 %v491
    %v577 = vunpack.c.l.b16 %v492
    %v578 = vunpack.c.l.b16 %v493
    %v579 = vunpack.c.h.b16 %v493
    %v580 = vunpack.c.l.b16 %v494
    %v581 = vunpack.c.l.b16 %v495
    %v582 = vunpack.c.h.b16 %v495
    %v583 = vunpack.c.l.b16 %v496
    %v584 = vunpack.c.l.b16 %v497
    %v585 = vunpack.c.h.b16 %v497
    %v586 = vunpack.c.l.b16 %v498
    %v587 = vunpack.c.l.b16 %v499
    %v588 = vunpack.c.h.b16 %v499
    %v589 = vunpack.c.l.b16 %v500
    %v590 = vpack.c.b16 %v545, %v542
    %v591 = vpack.c.b16 %v546, %v543
    %v592 = vpack.c.b16 %v547, %v544
    %v593 = vpack.c.b16 %v551, %v548
    %v594 = vpack.c.b16 %v552, %v549
    %v595 = vpack.c.b16 %v553, %v550
    %v596 = vpack.c.b16 %v557, %v554
    %v597 = vpack.c.b16 %v558, %v555
    %v598 = vpack.c.b16 %v559, %v556
    %v599 = vpack.c.b16 %v563, %v560
    %v600 = vpack.c.b16 %v564, %v561
    %v601 = vpack.c.b16 %v565, %v562
    %v602 = vpack.c.b16 %v569, %v566
    %v603 = vpack.c.b16 %v570, %v567
    %v604 = vpack.c.b16 %v571, %v568
    %v605 = vpack.c.b16 %v575, %v572
    %v606 = vpack.c.b16 %v576, %v573
    %v607 = vpack.c.b16 %v577, %v574
    %v608 = vpack.c.b16 %v581, %v578
    %v609 = vpack.c.b16 %v582, %v579
    %v610 = vpack.c.b16 %v583, %v580
    %v611 = vpack.c.b16 %v587, %v584
    %v612 = vpack.c.b16 %v588, %v585
    %v613 = vpack.c.b16 %v589, %v586
    %638 = vmatpush.bf16.msra.mxu0 %v611
    %639 = vmatpush.bf16.msra.mxu0 %v608
    %640 = vmatpush.bf16.msra.mxu0 %v605
    %641 = vmatpush.bf16.msra.mxu0 %v602
    %642 = vmatpush.bf16.msra.mxu0 %v599
    %643 = vmatpush.bf16.msra.mxu0 %v596
    %644 = vmatpush.bf16.msra.mxu0 %v593
    %645 = vmatpush.bf16.msra.mxu0 %v590
    %646 = vmatmul.bf16.gmra.mxu0 %v467
    %v647 = vpop.f32.mrf.mxu0
    %v648 = vadd.f32 %v504, %v647
    %v649 = vpop.f32.mrf.mxu0
    %650 = vdwg.mxu0
    %651 = vmatpush.bf16.msra.mxu0 %v612
    %652 = vmatpush.bf16.msra.mxu0 %v609
    %653 = vmatpush.bf16.msra.mxu0 %v606
    %654 = vmatpush.bf16.msra.mxu0 %v603
    %655 = vmatpush.bf16.msra.mxu0 %v600
    %656 = vmatpush.bf16.msra.mxu0 %v597
    %657 = vmatpush.bf16.msra.mxu0 %v594
    %658 = vmatpush.bf16.msra.mxu0 %v591
    %659 = vmatmul.bf16.gmra.mxu0 %v467
    %v660 = vpop.f32.mrf.mxu0
    %v661 = vadd.f32 %v505, %v660
    %v662 = vpop.f32.mrf.mxu0
    %663 = vdwg.mxu0
    %664 = vmatpush.bf16.msra.mxu0 %v613
    %665 = vmatpush.bf16.msra.mxu0 %v610
    %666 = vmatpush.bf16.msra.mxu0 %v607
    %667 = vmatpush.bf16.msra.mxu0 %v604
    %668 = vmatpush.bf16.msra.mxu0 %v601
    %669 = vmatpush.bf16.msra.mxu0 %v598
    %670 = vmatpush.bf16.msra.mxu0 %v595
    %671 = vmatpush.bf16.msra.mxu0 %v592
    %672 = vmatmul.bf16.gmra.mxu0 %v467
    %v673 = vpop.f32.mrf.mxu0
    %v674 = vadd.f32 %v506, %v673
    %v675 = vpop.f32.mrf.mxu0
    %676 = vdwg.mxu0
    %v677 = vpack.c.bf16 %v255, %v255
    %v678 = vld [vmem:[#allocation9] sm:$0xff]
    %v679 = vld [vmem:[#allocation9 + $0x8] sm:$0xf]
    %v680 = vld [vmem:[#allocation9 + $0xc] sm:$0xff]
    %v681 = vld [vmem:[#allocation9 + $0x14] sm:$0xf]
    %v682 = vld [vmem:[#allocation9 + $0x18] sm:$0xff]
    %v683 = vld [vmem:[#allocation9 + $0x20] sm:$0xf]
    %v684 = vld [vmem:[#allocation9 + $0x24] sm:$0xff]
    %v685 = vld [vmem:[#allocation9 + $0x2c] sm:$0xf]
    %v686 = vld [vmem:[#allocation9 + $0x30] sm:$0xff]
    %v687 = vld [vmem:[#allocation9 + $0x38] sm:$0xf]
    %v688 = vld [vmem:[#allocation9 + $0x3c] sm:$0xff]
    %v689 = vld [vmem:[#allocation9 + $0x44] sm:$0xf]
    %v690 = vld [vmem:[#allocation9 + $0x48] sm:$0xff]
    %v691 = vld [vmem:[#allocation9 + $0x50] sm:$0xf]
    %v692 = vld [vmem:[#allocation9 + $0x54] sm:$0xff]
    %v693 = vld [vmem:[#allocation9 + $0x5c] sm:$0xf]
    %v694 = vld [vmem:[#allocation9 + $0x60] sm:$0xff]
    %v695 = vld [vmem:[#allocation9 + $0x68] sm:$0xf]
    %v696 = vld [vmem:[#allocation9 + $0x6c] sm:$0xff]
    %v697 = vld [vmem:[#allocation9 + $0x74] sm:$0xf]
    %v698 = vld [vmem:[#allocation9 + $0x78] sm:$0xff]
    %v699 = vld [vmem:[#allocation9 + $0x80] sm:$0xf]
    %v700 = vld [vmem:[#allocation9 + $0x84] sm:$0xff]
    %v701 = vld [vmem:[#allocation9 + $0x8c] sm:$0xf]
    %v702 = vld [vmem:[#allocation9 + $0x90] sm:$0xff]
    %v703 = vld [vmem:[#allocation9 + $0x98] sm:$0xf]
    %v704 = vld [vmem:[#allocation9 + $0x9c] sm:$0xff]
    %v705 = vld [vmem:[#allocation9 + $0xa4] sm:$0xf]
    %v706 = vld [vmem:[#allocation9 + $0xa8] sm:$0xff]
    %v707 = vld [vmem:[#allocation9 + $0xb0] sm:$0xf]
    %v708 = vld [vmem:[#allocation9 + $0xb4] sm:$0xff]
    %v709 = vld [vmem:[#allocation9 + $0xbc] sm:$0xf]
    %v710 = vld [vmem:[%s5] sm:$0x7]
    %v712 = vperm.slane %v710, 0
    %v713 = vperm.slane %v710, 1
    %v714 = vperm.slane %v710, 2
    %v750 = vunpack.c.l.b16 %v678
    %v751 = vunpack.c.h.b16 %v678
    %v752 = vunpack.c.l.b16 %v679
    %v753 = vunpack.c.l.b16 %v680
    %v754 = vunpack.c.h.b16 %v680
    %v755 = vunpack.c.l.b16 %v681
    %v756 = vunpack.c.l.b16 %v682
    %v757 = vunpack.c.h.b16 %v682
    %v758 = vunpack.c.l.b16 %v683
    %v759 = vunpack.c.l.b16 %v684
    %v760 = vunpack.c.h.b16 %v684
    %v761 = vunpack.c.l.b16 %v685
    %v762 = vunpack.c.l.b16 %v686
    %v763 = vunpack.c.h.b16 %v686
    %v764 = vunpack.c.l.b16 %v687
    %v765 = vunpack.c.l.b16 %v688
    %v766 = vunpack.c.h.b16 %v688
    %v767 = vunpack.c.l.b16 %v689
    %v768 = vunpack.c.l.b16 %v690
    %v769 = vunpack.c.h.b16 %v690
    %v770 = vunpack.c.l.b16 %v691
    %v771 = vunpack.c.l.b16 %v692
    %v772 = vunpack.c.h.b16 %v692
    %v773 = vunpack.c.l.b16 %v693
    %v774 = vunpack.c.l.b16 %v694
    %v775 = vunpack.c.h.b16 %v694
    %v776 = vunpack.c.l.b16 %v695
    %v777 = vunpack.c.l.b16 %v696
    %v778 = vunpack.c.h.b16 %v696
    %v779 = vunpack.c.l.b16 %v697
    %v780 = vunpack.c.l.b16 %v698
    %v781 = vunpack.c.h.b16 %v698
    %v782 = vunpack.c.l.b16 %v699
    %v783 = vunpack.c.l.b16 %v700
    %v784 = vunpack.c.h.b16 %v700
    %v785 = vunpack.c.l.b16 %v701
    %v786 = vunpack.c.l.b16 %v702
    %v787 = vunpack.c.h.b16 %v702
    %v788 = vunpack.c.l.b16 %v703
    %v789 = vunpack.c.l.b16 %v704
    %v790 = vunpack.c.h.b16 %v704
    %v791 = vunpack.c.l.b16 %v705
    %v792 = vunpack.c.l.b16 %v706
    %v793 = vunpack.c.h.b16 %v706
    %v794 = vunpack.c.l.b16 %v707
    %v795 = vunpack.c.l.b16 %v708
    %v796 = vunpack.c.h.b16 %v708
    %v797 = vunpack.c.l.b16 %v709
    %v798 = vpack.c.b16 %v753, %v750
    %v799 = vpack.c.b16 %v754, %v751
    %v800 = vpack.c.b16 %v755, %v752
    %v801 = vpack.c.b16 %v759, %v756
    %v802 = vpack.c.b16 %v760, %v757
    %v803 = vpack.c.b16 %v761, %v758
    %v804 = vpack.c.b16 %v765, %v762
    %v805 = vpack.c.b16 %v766, %v763
    %v806 = vpack.c.b16 %v767, %v764
    %v807 = vpack.c.b16 %v771, %v768
    %v808 = vpack.c.b16 %v772, %v769
    %v809 = vpack.c.b16 %v773, %v770
    %v810 = vpack.c.b16 %v777, %v774
    %v811 = vpack.c.b16 %v778, %v775
    %v812 = vpack.c.b16 %v779, %v776
    %v813 = vpack.c.b16 %v783, %v780
    %v814 = vpack.c.b16 %v784, %v781
    %v815 = vpack.c.b16 %v785, %v782
    %v816 = vpack.c.b16 %v789, %v786
    %v817 = vpack.c.b16 %v790, %v787
    %v818 = vpack.c.b16 %v791, %v788
    %v819 = vpack.c.b16 %v795, %v792
    %v820 = vpack.c.b16 %v796, %v793
    %v821 = vpack.c.b16 %v797, %v794
    %846 = vmatpush.bf16.msra.mxu0 %v819
    %847 = vmatpush.bf16.msra.mxu0 %v816
    %848 = vmatpush.bf16.msra.mxu0 %v813
    %849 = vmatpush.bf16.msra.mxu0 %v810
    %850 = vmatpush.bf16.msra.mxu0 %v807
    %851 = vmatpush.bf16.msra.mxu0 %v804
    %852 = vmatpush.bf16.msra.mxu0 %v801
    %853 = vmatpush.bf16.msra.mxu0 %v798
    %854 = vmatmul.bf16.gmra.mxu0 %v677
    %v855 = vpop.f32.mrf.mxu0
    %v856 = vadd.f32 %v712, %v855
    %v857 = vpop.f32.mrf.mxu0
    %858 = vdwg.mxu0
    %859 = vmatpush.bf16.msra.mxu0 %v820
    %860 = vmatpush.bf16.msra.mxu0 %v817
    %861 = vmatpush.bf16.msra.mxu0 %v814
    %862 = vmatpush.bf16.msra.mxu0 %v811
    %863 = vmatpush.bf16.msra.mxu0 %v808
    %864 = vmatpush.bf16.msra.mxu0 %v805
    %865 = vmatpush.bf16.msra.mxu0 %v802
    %866 = vmatpush.bf16.msra.mxu0 %v799
    %867 = vmatmul.bf16.gmra.mxu0 %v677
    %v868 = vpop.f32.mrf.mxu0
    %v869 = vadd.f32 %v713, %v868
    %v870 = vpop.f32.mrf.mxu0
    %871 = vdwg.mxu0
    %872 = vmatpush.bf16.msra.mxu0 %v821
    %873 = vmatpush.bf16.msra.mxu0 %v818
    %874 = vmatpush.bf16.msra.mxu0 %v815
    %875 = vmatpush.bf16.msra.mxu0 %v812
    %876 = vmatpush.bf16.msra.mxu0 %v809
    %877 = vmatpush.bf16.msra.mxu0 %v806
    %878 = vmatpush.bf16.msra.mxu0 %v803
    %879 = vmatpush.bf16.msra.mxu0 %v800
    %880 = vmatmul.bf16.gmra.mxu0 %v677
    %v881 = vpop.f32.mrf.mxu0
    %v882 = vadd.f32 %v714, %v881
    %v883 = vpop.f32.mrf.mxu0
    %884 = vdwg.mxu0
    %v885 = vadd.f32 %v856, %v436
    %v886 = vxor.u32 %v885, 2147483648
    %v887 = vmul.f32 %v886, 1.442695
    %v888 = vpow.pop %v887
    %v889 = vadd.f32 %v888, 1.0
    %v890 = vrcp.pop %v889
    %v891 = vmul.f32 %v889, %v890
    %v892 = vsub.f32 1.0, %v891
    %v893 = vmul.f32 %v890, %v892
    %v894 = vadd.f32 %v890, %v893
    %vm895 = vweird.f32 %v889
    %vm896 = vweird.f32 %v890
    %vm897 = vmor %vm895, %vm896
    %v898 = vsel %vm897, %v890, %v894
    %v899 = vand.u32 2147483647, %v889
    %vm900 = vcmp.eq.f32.partialorder %v899, 8.507059e+37
    %v901 = vand.u32 %v889, 2147483648
    %v902 = vor.u32 1.1754944e-38, %v901
    %v903 = vsel %vm900, %v902, %v898
    %v904 = vmul.f32 1.0, %v903
    %v905 = vadd.f32 %v869, %v449
    %v906 = vxor.u32 %v905, 2147483648
    %v907 = vmul.f32 %v906, 1.442695
    %v908 = vpow.pop %v907
    %v909 = vadd.f32 %v908, 1.0
    %v910 = vrcp.pop %v909
    %v911 = vmul.f32 %v909, %v910
    %v912 = vsub.f32 1.0, %v911
    %v913 = vmul.f32 %v910, %v912
    %v914 = vadd.f32 %v910, %v913
    %vm915 = vweird.f32 %v909
    %vm916 = vweird.f32 %v910
    %vm917 = vmor %vm915, %vm916
    %v918 = vsel %vm917, %v910, %v914
    %v919 = vand.u32 2147483647, %v909
    %vm920 = vcmp.eq.f32.partialorder %v919, 8.507059e+37
    %v921 = vand.u32 %v909, 2147483648
    %v922 = vor.u32 1.1754944e-38, %v921
    %v923 = vsel %vm920, %v922, %v918
    %v924 = vmul.f32 1.0, %v923
    %v925 = vmul.f32 %v904, %v462
    %v926 = vadd.f32 %v882, %v925
    %v927 = vtanh.pop %v926
    %v928 = vsub.f32 1.0, %v924
    %v929 = vmul.f32 %v928, %v927
    %v930 = vmul.f32 %v924, %v256
    %v931 = vadd.f32 %v929, %v930
    %932 = vst [vmem:[#allocation15] sm:$0xff] %v931
    %v933 = vpack.c.bf16 %v931, %v931
    %s934 = scalar_lea.vmem [#allocation9], 192
    %v935 = vld [vmem:[%s934] sm:$0xff]
    %v936 = vld [vmem:[%s934 + $0x8] sm:$0xf]
    %v937 = vld [vmem:[%s934 + $0xc] sm:$0xff]
    %v938 = vld [vmem:[%s934 + $0x14] sm:$0xf]
    %v939 = vld [vmem:[%s934 + $0x18] sm:$0xff]
    %v940 = vld [vmem:[%s934 + $0x20] sm:$0xf]
    %v941 = vld [vmem:[%s934 + $0x24] sm:$0xff]
    %v942 = vld [vmem:[%s934 + $0x2c] sm:$0xf]
    %v943 = vld [vmem:[%s934 + $0x30] sm:$0xff]
    %v944 = vld [vmem:[%s934 + $0x38] sm:$0xf]
    %v945 = vld [vmem:[%s934 + $0x3c] sm:$0xff]
    %v946 = vld [vmem:[%s934 + $0x44] sm:$0xf]
    %v947 = vld [vmem:[%s934 + $0x48] sm:$0xff]
    %v948 = vld [vmem:[%s934 + $0x50] sm:$0xf]
    %v949 = vld [vmem:[%s934 + $0x54] sm:$0xff]
    %v950 = vld [vmem:[%s934 + $0x5c] sm:$0xf]
    %v951 = vld [vmem:[%s934 + $0x60] sm:$0xff]
    %v952 = vld [vmem:[%s934 + $0x68] sm:$0xf]
    %v953 = vld [vmem:[%s934 + $0x6c] sm:$0xff]
    %v954 = vld [vmem:[%s934 + $0x74] sm:$0xf]
    %v955 = vld [vmem:[%s934 + $0x78] sm:$0xff]
    %v956 = vld [vmem:[%s934 + $0x80] sm:$0xf]
    %v957 = vld [vmem:[%s934 + $0x84] sm:$0xff]
    %v958 = vld [vmem:[%s934 + $0x8c] sm:$0xf]
    %v959 = vld [vmem:[%s934 + $0x90] sm:$0xff]
    %v960 = vld [vmem:[%s934 + $0x98] sm:$0xf]
    %v961 = vld [vmem:[%s934 + $0x9c] sm:$0xff]
    %v962 = vld [vmem:[%s934 + $0xa4] sm:$0xf]
    %v963 = vld [vmem:[%s934 + $0xa8] sm:$0xff]
    %v964 = vld [vmem:[%s934 + $0xb0] sm:$0xf]
    %v965 = vld [vmem:[%s934 + $0xb4] sm:$0xff]
    %v966 = vld [vmem:[%s934 + $0xbc] sm:$0xf]
    %s967 = scalar_lea.vmem %s5, 3
    %v968 = vld [vmem:[%s967] sm:$0x7]
    %v970 = vperm.slane %v968, 0
    %v971 = vperm.slane %v968, 1
    %v972 = vperm.slane %v968, 2
    %v1008 = vunpack.c.l.b16 %v935
    %v1009 = vunpack.c.h.b16 %v935
    %v1010 = vunpack.c.l.b16 %v936
    %v1011 = vunpack.c.l.b16 %v937
    %v1012 = vunpack.c.h.b16 %v937
    %v1013 = vunpack.c.l.b16 %v938
    %v1014 = vunpack.c.l.b16 %v939
    %v1015 = vunpack.c.h.b16 %v939
    %v1016 = vunpack.c.l.b16 %v940
    %v1017 = vunpack.c.l.b16 %v941
    %v1018 = vunpack.c.h.b16 %v941
    %v1019 = vunpack.c.l.b16 %v942
    %v1020 = vunpack.c.l.b16 %v943
    %v1021 = vunpack.c.h.b16 %v943
    %v1022 = vunpack.c.l.b16 %v944
    %v1023 = vunpack.c.l.b16 %v945
    %v1024 = vunpack.c.h.b16 %v945
    %v1025 = vunpack.c.l.b16 %v946
    %v1026 = vunpack.c.l.b16 %v947
    %v1027 = vunpack.c.h.b16 %v947
    %v1028 = vunpack.c.l.b16 %v948
    %v1029 = vunpack.c.l.b16 %v949
    %v1030 = vunpack.c.h.b16 %v949
    %v1031 = vunpack.c.l.b16 %v950
    %v1032 = vunpack.c.l.b16 %v951
    %v1033 = vunpack.c.h.b16 %v951
    %v1034 = vunpack.c.l.b16 %v952
    %v1035 = vunpack.c.l.b16 %v953
    %v1036 = vunpack.c.h.b16 %v953
    %v1037 = vunpack.c.l.b16 %v954
    %v1038 = vunpack.c.l.b16 %v955
    %v1039 = vunpack.c.h.b16 %v955
    %v1040 = vunpack.c.l.b16 %v956
    %v1041 = vunpack.c.l.b16 %v957
    %v1042 = vunpack.c.h.b16 %v957
    %v1043 = vunpack.c.l.b16 %v958
    %v1044 = vunpack.c.l.b16 %v959
    %v1045 = vunpack.c.h.b16 %v959
    %v1046 = vunpack.c.l.b16 %v960
    %v1047 = vunpack.c.l.b16 %v961
    %v1048 = vunpack.c.h.b16 %v961
    %v1049 = vunpack.c.l.b16 %v962
    %v1050 = vunpack.c.l.b16 %v963
    %v1051 = vunpack.c.h.b16 %v963
    %v1052 = vunpack.c.l.b16 %v964
    %v1053 = vunpack.c.l.b16 %v965
    %v1054 = vunpack.c.h.b16 %v965
    %v1055 = vunpack.c.l.b16 %v966
    %v1056 = vpack.c.b16 %v1011, %v1008
    %v1057 = vpack.c.b16 %v1012, %v1009
    %v1058 = vpack.c.b16 %v1013, %v1010
    %v1059 = vpack.c.b16 %v1017, %v1014
    %v1060 = vpack.c.b16 %v1018, %v1015
    %v1061 = vpack.c.b16 %v1019, %v1016
    %v1062 = vpack.c.b16 %v1023, %v1020
    %v1063 = vpack.c.b16 %v1024, %v1021
    %v1064 = vpack.c.b16 %v1025, %v1022
    %v1065 = vpack.c.b16 %v1029, %v1026
    %v1066 = vpack.c.b16 %v1030, %v1027
    %v1067 = vpack.c.b16 %v1031, %v1028
    %v1068 = vpack.c.b16 %v1035, %v1032
    %v1069 = vpack.c.b16 %v1036, %v1033
    %v1070 = vpack.c.b16 %v1037, %v1034
    %v1071 = vpack.c.b16 %v1041, %v1038
    %v1072 = vpack.c.b16 %v1042, %v1039
    %v1073 = vpack.c.b16 %v1043, %v1040
    %v1074 = vpack.c.b16 %v1047, %v1044
    %v1075 = vpack.c.b16 %v1048, %v1045
    %v1076 = vpack.c.b16 %v1049, %v1046
    %v1077 = vpack.c.b16 %v1053, %v1050
    %v1078 = vpack.c.b16 %v1054, %v1051
    %v1079 = vpack.c.b16 %v1055, %v1052
    %1104 = vmatpush.bf16.msra.mxu0 %v1077
    %1105 = vmatpush.bf16.msra.mxu0 %v1074
    %1106 = vmatpush.bf16.msra.mxu0 %v1071
    %1107 = vmatpush.bf16.msra.mxu0 %v1068
    %1108 = vmatpush.bf16.msra.mxu0 %v1065
    %1109 = vmatpush.bf16.msra.mxu0 %v1062
    %1110 = vmatpush.bf16.msra.mxu0 %v1059
    %1111 = vmatpush.bf16.msra.mxu0 %v1056
    %1112 = vmatmul.bf16.gmra.mxu0 %v933
    %v1113 = vpop.f32.mrf.mxu0
    %v1114 = vadd.f32 %v970, %v1113
    %v1115 = vpop.f32.mrf.mxu0
    %1116 = vdwg.mxu0
    %1117 = vmatpush.bf16.msra.mxu0 %v1078
    %1118 = vmatpush.bf16.msra.mxu0 %v1075
    %1119 = vmatpush.bf16.msra.mxu0 %v1072
    %1120 = vmatpush.bf16.msra.mxu0 %v1069
    %1121 = vmatpush.bf16.msra.mxu0 %v1066
    %1122 = vmatpush.bf16.msra.mxu0 %v1063
    %1123 = vmatpush.bf16.msra.mxu0 %v1060
    %1124 = vmatpush.bf16.msra.mxu0 %v1057
    %1125 = vmatmul.bf16.gmra.mxu0 %v933
    %v1126 = vpop.f32.mrf.mxu0
    %v1127 = vadd.f32 %v971, %v1126
    %v1128 = vpop.f32.mrf.mxu0
    %1129 = vdwg.mxu0
    %1130 = vmatpush.bf16.msra.mxu0 %v1079
    %1131 = vmatpush.bf16.msra.mxu0 %v1076
    %1132 = vmatpush.bf16.msra.mxu0 %v1073
    %1133 = vmatpush.bf16.msra.mxu0 %v1070
    %1134 = vmatpush.bf16.msra.mxu0 %v1067
    %1135 = vmatpush.bf16.msra.mxu0 %v1064
    %1136 = vmatpush.bf16.msra.mxu0 %v1061
    %1137 = vmatpush.bf16.msra.mxu0 %v1058
    %1138 = vmatmul.bf16.gmra.mxu0 %v933
    %v1139 = vpop.f32.mrf.mxu0
    %v1140 = vadd.f32 %v972, %v1139
    %v1141 = vpop.f32.mrf.mxu0
    %1142 = vdwg.mxu0
    %v1143 = vadd.f32 %v1114, %v648
    %v1144 = vxor.u32 %v1143, 2147483648
    %v1145 = vmul.f32 %v1144, 1.442695
    %v1146 = vpow.pop %v1145
    %v1147 = vadd.f32 %v1146, 1.0
    %v1148 = vrcp.pop %v1147
    %v1149 = vmul.f32 %v1147, %v1148
    %v1150 = vsub.f32 1.0, %v1149
    %v1151 = vmul.f32 %v1148, %v1150
    %v1152 = vadd.f32 %v1148, %v1151
    %vm1153 = vweird.f32 %v1147
    %vm1154 = vweird.f32 %v1148
    %vm1155 = vmor %vm1153, %vm1154
    %v1156 = vsel %vm1155, %v1148, %v1152
    %v1157 = vand.u32 2147483647, %v1147
    %vm1158 = vcmp.eq.f32.partialorder %v1157, 8.507059e+37
    %v1159 = vand.u32 %v1147, 2147483648
    %v1160 = vor.u32 1.1754944e-38, %v1159
    %v1161 = vsel %vm1158, %v1160, %v1156
    %v1162 = vmul.f32 1.0, %v1161
    %v1163 = vadd.f32 %v1127, %v661
    %v1164 = vxor.u32 %v1163, 2147483648
    %v1165 = vmul.f32 %v1164, 1.442695
    %v1166 = vpow.pop %v1165
    %v1167 = vadd.f32 %v1166, 1.0
    %v1168 = vrcp.pop %v1167
    %v1169 = vmul.f32 %v1167, %v1168
    %v1170 = vsub.f32 1.0, %v1169
    %v1171 = vmul.f32 %v1168, %v1170
    %v1172 = vadd.f32 %v1168, %v1171
    %vm1173 = vweird.f32 %v1167
    %vm1174 = vweird.f32 %v1168
    %vm1175 = vmor %vm1173, %vm1174
    %v1176 = vsel %vm1175, %v1168, %v1172
    %v1177 = vand.u32 2147483647, %v1167
    %vm1178 = vcmp.eq.f32.partialorder %v1177, 8.507059e+37
    %v1179 = vand.u32 %v1167, 2147483648
    %v1180 = vor.u32 1.1754944e-38, %v1179
    %v1181 = vsel %vm1178, %v1180, %v1176
    %v1182 = vmul.f32 1.0, %v1181
    %v1183 = vmul.f32 %v1162, %v674
    %v1184 = vadd.f32 %v1140, %v1183
    %v1185 = vtanh.pop %v1184
    %v1186 = vsub.f32 1.0, %v1182
    %v1187 = vmul.f32 %v1186, %v1185
    %v1188 = vmul.f32 %v1182, %v466
    %v1189 = vadd.f32 %v1187, %v1188
    %s1190 = scalar_lea.vmem [#allocation15], 8
    %1191 = vst [vmem:[%s1190] sm:$0xff] %v1189
    %v1192 = vpack.c.bf16 %v1189, %v1189
    %v1193 = vld [vmem:[#allocation12] sm:$0xf]
    %v1194 = vld [vmem:[#allocation12 + $0x4] sm:$0xf]
    %v1195 = vld [vmem:[#allocation12 + $0x8] sm:$0xf]
    %v1196 = vld [vmem:[#allocation12 + $0xc] sm:$0xf]
    %v1197 = vld [vmem:[#allocation12 + $0x10] sm:$0xf]
    %v1198 = vld [vmem:[#allocation12 + $0x14] sm:$0xf]
    %v1199 = vld [vmem:[#allocation12 + $0x18] sm:$0xf]
    %v1200 = vld [vmem:[#allocation12 + $0x1c] sm:$0xf]
    %v1201 = vld [vmem:[#allocation12 + $0x20] sm:$0xf]
    %v1202 = vld [vmem:[#allocation12 + $0x24] sm:$0xf]
    %v1203 = vld [vmem:[#allocation12 + $0x28] sm:$0xf]
    %v1204 = vld [vmem:[#allocation12 + $0x2c] sm:$0xf]
    %v1205 = vld [vmem:[#allocation12 + $0x30] sm:$0xf]
    %v1206 = vld [vmem:[#allocation12 + $0x34] sm:$0xf]
    %v1207 = vld [vmem:[#allocation12 + $0x38] sm:$0xf]
    %v1208 = vld [vmem:[#allocation12 + $0x3c] sm:$0xf]
    %v1209 = vld [vmem:[%s8] sm:$0x1]
    %v1211 = vperm.slane %v1209, 0
    %v1229 = vunpack.c.l.b16 %v1193
    %v1230 = vunpack.c.l.b16 %v1194
    %v1231 = vunpack.c.l.b16 %v1195
    %v1232 = vunpack.c.l.b16 %v1196
    %v1233 = vunpack.c.l.b16 %v1197
    %v1234 = vunpack.c.l.b16 %v1198
    %v1235 = vunpack.c.l.b16 %v1199
    %v1236 = vunpack.c.l.b16 %v1200
    %v1237 = vunpack.c.l.b16 %v1201
    %v1238 = vunpack.c.l.b16 %v1202
    %v1239 = vunpack.c.l.b16 %v1203
    %v1240 = vunpack.c.l.b16 %v1204
    %v1241 = vunpack.c.l.b16 %v1205
    %v1242 = vunpack.c.l.b16 %v1206
    %v1243 = vunpack.c.l.b16 %v1207
    %v1244 = vunpack.c.l.b16 %v1208
    %v1245 = vpack.c.b16 %v1230, %v1229
    %v1246 = vpack.c.b16 %v1232, %v1231
    %v1247 = vpack.c.b16 %v1234, %v1233
    %v1248 = vpack.c.b16 %v1236, %v1235
    %v1249 = vpack.c.b16 %v1238, %v1237
    %v1250 = vpack.c.b16 %v1240, %v1239
    %v1251 = vpack.c.b16 %v1242, %v1241
    %v1252 = vpack.c.b16 %v1244, %v1243
    %1261 = vmatpush.bf16.msra.mxu0 %v1252
    %1262 = vmatpush.bf16.msra.mxu0 %v1251
    %1263 = vmatpush.bf16.msra.mxu0 %v1250
    %1264 = vmatpush.bf16.msra.mxu0 %v1249
    %1265 = vmatpush.bf16.msra.mxu0 %v1248
    %1266 = vmatpush.bf16.msra.mxu0 %v1247
    %1267 = vmatpush.bf16.msra.mxu0 %v1246
    %1268 = vmatpush.bf16.msra.mxu0 %v1245
    %1269 = vmatmul.bf16.gmra.mxu0 %v1192
    %v1270 = vpop.f32.mrf.mxu0
    %v1271 = vadd.f32 %v1211, %v1270
    %v1272 = vpop.f32.mrf.mxu0
    %1273 = vdwg.mxu0
    %1274 = vmax.xlane.f32.xlu0 %v1271
    %v1275 = vpop.xlane.xlu0 %1274
    %v1276 = vsub.f32 %v1271, %v1275
    %v1277 = vmul.f32 %v1276, 1.442695
    %v1278 = vpow.pop %v1277
    %1279 = vadd.xlane.f32.xlu0 %v1278
    %v1280 = vpop.xlane.xlu0 %1279
    %v1281 = vlog2.pop %v1280
    %v1282 = vmul.f32 %v1281, 0.6931472
    %v1283 = vsub.f32 %v1276, %v1282
    %1284 = vst [vmem:[#allocation14] sm:$0xff] %v1283
    // Predicated region
    $region78: #{tpu_custom_call.1} parent=1 // pred_check
      _
    $region79: #{tpu_custom_call.1} parent=1 // pred_check_branch
      %1286 = sbr.rel (0) target = $region81
    $region80: #{tpu_custom_call.1} parent=1 // pred_region
      %1288 = vsyncadd [#allocation8], 0
      %s1290 = sshll.u32 [#allocation14], 4
      %s1291 = int_to_ptr.vmem [resolvable:$true] %s1290
      %s1292 = sshll.u32 %s9, 4
      %s1293 = int_to_ptr.hbm [resolvable:$true] %s1292
      %1295 = dma.vmem_to_hbm [thread:$0]  %s1291, 128, %s1293, [#allocation8]
    $region81: #{tpu_custom_call.1} parent=1 // pred_fallthru
      _
    // Predicated region
    $region82: #{tpu_custom_call.1} parent=1 // pred_check
      _
    $region83: #{tpu_custom_call.1} parent=1 // pred_check_branch
      %1297 = sbr.rel (0) target = $region85
    $region84: #{tpu_custom_call.1} parent=1 // pred_region
      %1299 = vsyncadd [#allocation16], 0
      %s1300 = sshll.u32 [#allocation15], 4
      %s1301 = int_to_ptr.vmem [resolvable:$true] %s1300
      %s1302 = sshll.u32 %s10, 4
      %s1303 = int_to_ptr.hbm [resolvable:$true] %s1302
      %1308 = dma.vmem_to_hbm [thread:$0]  %s1301, 256, %s1303, [#allocation16], 128, 128, 8
    $region85: #{tpu_custom_call.1} parent=1 // pred_fallthru
      _
    // Predicated region
    $region86: #{tpu_custom_call.1} parent=1 // pred_check
      _
    $region87: #{tpu_custom_call.1} parent=1 // pred_check_branch
      %1310 = sbr.rel (0) target = $region89
    $region88: #{tpu_custom_call.1} parent=1 // pred_region
      %1312 = dma.done [#allocation8], 128
    $region89: #{tpu_custom_call.1} parent=1 // pred_fallthru
      _
    // Predicated region
    $region90: #{tpu_custom_call.1} parent=1 // pred_check
      _
    $region91: #{tpu_custom_call.1} parent=1 // pred_check_branch
      %1314 = sbr.rel (0) target = $region93
    $region92: #{tpu_custom_call.1} parent=1 // pred_region
      %1316 = dma.done [#allocation16], 256
    $region93: #{tpu_custom_call.1} parent=1 // pred_fallthru
      _
    %1317 = vsyncpa [#allocation7], 1
    %1318 = vsyncpa [#allocation10], 1
    %1319 = vsyncpa [#allocation13], 1
    %1320 = vsyncpa [#allocation8], 1
    %1321 = vsyncpa [#allocation16], 1
  %1322 = vsyncmov [#allocation3]
  %s1323 = vpop.sfrf %1322
  %p1324 = scmp.eq.s32.totalorder %s1323, 0
  %p1325 = pneg %p1324
  %1327 = shalt.err (%p1325)
  %s1328 = scalar_lea.sflag [#allocation3], 1
  %1329 = vsyncmov %s1328
  %s1330 = vpop.sfrf %1329
  %p1331 = scmp.eq.s32.totalorder %s1330, 0
  %p1332 = pneg %p1331
  %1334 = shalt.err (%p1332)
  %s1335 = scalar_lea.sflag [#allocation3], 2
  %1336 = vsyncmov %s1335
  %s1337 = vpop.sfrf %1336
  %p1338 = scmp.eq.s32.totalorder %s1337, 0
  %p1339 = pneg %p1338
  %1341 = shalt.err (%p1339)
  %s1342 = scalar_lea.sflag [#allocation3], 3
  %1343 = vsyncmov %s1342
  %s1344 = vpop.sfrf %1343
  %p1345 = scmp.eq.s32.totalorder %s1344, 0
  %p1346 = pneg %p1345
  %1348 = shalt.err (%p1346)
  %s1349 = scalar_lea.sflag [#allocation3], 4
  %1350 = vsyncmov %s1349
  %s1351 = vpop.sfrf %1350
  %p1352 = scmp.eq.s32.totalorder %s1351, 0
  %p1353 = pneg %p1352
  %1355 = shalt.err (%p1353)
  %s1356 = scalar_lea.sflag [#allocation3], 5
  %1357 = vsyncmov %s1356
  %s1358 = vpop.sfrf %1357
  %p1359 = scmp.eq.s32.totalorder %s1358, 0
  %p1360 = pneg %p1359
  %1362 = shalt.err (%p1360)
  %s1363 = scalar_lea.sflag [#allocation3], 6
  %1364 = vsyncmov %s1363
  %s1365 = vpop.sfrf %1364
  %p1366 = scmp.eq.s32.totalorder %s1365, 0
  %p1367 = pneg %p1366
  %1369 = shalt.err (%p1367)
  %s1370 = scalar_lea.sflag [#allocation3], 7
  %1371 = vsyncmov %s1370
  %s1372 = vpop.sfrf %1371
  %p1373 = scmp.eq.s32.totalorder %s1372, 0
  %p1374 = pneg %p1373
  %1376 = shalt.err (%p1374)

</llo_original>
